<compile_context>
chip_gen: v7x
topology: tpu7x:2x2x1
jax: 0.10.0
libtpu: 0.0.40
codegen_flags: <defaults>
</compile_context>

<pallas_src>
import numpy as np

import jax
import jax.numpy as jnp
from jax import lax
from jax.experimental import pallas as pl
from jax.experimental.pallas import tpu as pltpu


def _round_up(n, m):
    return ((n + m - 1) // m) * m


# ----------------------------------------------------------------------------
# One-time probe: confirm pltpu.roll follows np.roll semantics on this
# backend.  If it does not (or fails to lower), fall back to an equivalent
# two-slice + lane-concat shift.  With the factored conv the fallback is
# bounded at <= 12 concat-shifts per grid step (it used to be ~200).
# ----------------------------------------------------------------------------
_ROLL_OK = None


def _roll_matches_numpy():
    global _ROLL_OK
    if _ROLL_OK is None:
        try:
            def probe(x_ref, o_ref):
                o_ref[...] = pltpu.roll(x_ref[...], shift=1, axis=1)

            x = jnp.arange(8 * 128, dtype=jnp.float32).reshape(8, 128)
            out = pl.pallas_call(
                probe, out_shape=jax.ShapeDtypeStruct((8, 128), jnp.float32))(x)
            _ROLL_OK = bool(jnp.array_equal(out, jnp.roll(x, 1, axis=1)))
        except Exception:
            _ROLL_OK = False
    return _ROLL_OK


def _pick_vmem_limit():
    """~half the chip's VMEM (<= 96 MiB) when queryable, else 32 MiB."""
    default = 32 * 1024 * 1024
    try:
        cap = getattr(pltpu.get_tpu_info(), "vmem_capacity_bytes", None)
        if cap:
            return int(min(cap // 2, 96 * 1024 * 1024))
    except Exception:
        pass
    return default


def _pick_block_batch(B, C, HW, vmem_limit):
    """Images per grid step: big enough to amortize per-step overhead, small
    enough for double-buffered in/out blocks plus live intermediates to fit
    the VMEM budget, while keeping >= 2 grid steps for the parallel axis."""
    per_img = C * HW * 4
    budget = max(vmem_limit // 2, 4 * 1024 * 1024)
    max_bt = max(1, budget // (6 * per_img))
    divisors = [d for d in range(1, B + 1) if B % d == 0]
    fits = [d for d in divisors if d <= max_bt] or [1]
    bt = max(fits)
    if bt == B and B >= 2:          # keep two grid steps so megacore can split
        smaller = [d for d in fits if d < B]
        if smaller:
            bt = max(smaller)
    return bt


# ----------------------------------------------------------------------------
# Fused CBAM kernel (Bt batch images per grid step)
# ----------------------------------------------------------------------------
def _make_cbam_kernel(H, W, L, Bt, use_roll):
    HW = H * W

    def lshift(p, s):
        """q[:, n] = p[:, (n + s) % L]  — lane-only rotation (XLU slot)."""
        s = s % L
        if s == 0:
            return p
        if use_roll:
            return pltpu.roll(p, shift=L - s, axis=1)
        return jnp.concatenate([p[:, s:], p[:, :s]], axis=1)

    def kernel(x_ref, w1_ref, w2_ref, wc_ref, masks_ref, out_ref):
        # ------------------ channel attention (whole block) ------------------
        avgs, maxs = [], []
        for b in range(Bt):
            xb = x_ref[b]                                    # (C, HW) lane-dense
            avgs.append(jnp.mean(xb, axis=1, keepdims=True))
            maxs.append(jnp.max(xb, axis=1, keepdims=True))
        pooled = jnp.concatenate(avgs + maxs, axis=1)        # (C, 2*Bt)

        # shared MLP, all pooled vectors of the block in one batched pass
        h = jnp.maximum(
            jnp.dot(w1_ref[...], pooled, preferred_element_type=jnp.float32),
            0.0)                                             # (hidden, 2*Bt)
        o = jnp.dot(w2_ref[...], h, preferred_element_type=jnp.float32)  # (C, 2*Bt)

        scales, cmeans, cmaxs = [], [], []
        for b in range(Bt):
            s = jax.nn.sigmoid(o[:, b:b + 1] + o[:, Bt + b:Bt + b + 1])  # (C, 1)
            scales.append(s)
            f1 = x_ref[b] * s                                # (C, HW), transient
            cmeans.append(jnp.mean(f1, axis=0, keepdims=True))
            cmaxs.append(jnp.max(f1, axis=0, keepdims=True))

        # --------------------- spatial attention (7x7) -----------------------
        # All 2*Bt channel-stat maps stacked on sublanes, row-flattened, with
        # 3 zero rows of vertical 'same' padding on top and >=3 rows of zeros
        # + lane round-up at the bottom.  Horizontal validity is handled by
        # one per-kw column mask; wrap-around taps land in the zero pads.
        maps = jnp.concatenate(cmeans + cmaxs, axis=0)       # (2*Bt, HW)
        p = jnp.concatenate(
            [jnp.zeros((2 * Bt, 3 * W), jnp.float32),
             maps,
             jnp.zeros((2 * Bt, L - HW - 3 * W), jnp.float32)], axis=1)  # (2*Bt, L)

        # 7 vertical pre-shifts shared by all 49 taps (6 rolls total).
        vshift = [p] + [lshift(p, kh * W) for kh in range(1, 7)]

        wc = wc_ref[...]                                     # (2*Bt, 49) weights
        masks = masks_ref[...]                               # (7, HW)

        acc = None
        for kw in range(7):
            t = None
            for kh in range(7):
                col = wc[:, kh * 7 + kw:kh * 7 + kw + 1]     # (2*Bt, 1)
                term = col * vshift[kh]                      # (2*Bt, L), VPU
                t = term if t is None else t + term
            t = lshift(t, kw - 3)[:, :HW]                    # 1 roll per kw
            if kw != 3:                                      # kw == 3 always valid
                t = t * masks[kw:kw + 1, :]
            acc = t if acc is None else acc + t              # (2*Bt, HW)

        # ----------------------- fused output store --------------------------
        for b in range(Bt):
            att = jax.nn.sigmoid(acc[b:b + 1, :] + acc[Bt + b:Bt + b + 1, :])
            out_ref[b] = (x_ref[b] * scales[b]) * att        # f2 = x*scale*att

    return kernel


# ----------------------------------------------------------------------------
# Wrapper: NCHW in / NCHW out, no transposes, no pads — only free reshapes.
#   w1: (hidden, C)   — PyTorch conv1 weight (1x1, no bias), squeezed
#   w2: (C, hidden)   — PyTorch conv2 weight (1x1, no bias), squeezed
#   w_sp: (2, 7, 7)   — PyTorch spatial 7x7 conv weight (2 -> 1, no bias)
# ----------------------------------------------------------------------------
def cbam(x_nchw, w1, w2, w_sp):
    B, C, H, W = x_nchw.shape
    hidden = w1.shape[0]
    HW = H * W
    # TODO(synk): generalize the layout (lane padding of HW, sublane padding
    # of C) so production CBAM spatial sizes (56x56, 28x28, 7x7) are accepted.
    assert C % 8 == 0 and HW % 128 == 0, "toy-size layout assumptions (C%8, H*W%128)"
    L = _round_up(HW + 6 * W, 128)
    # invariants the zero-pad / wrap-around tap scheme relies on
    assert L >= HW + 6 * W and L - HW - 3 * W >= 3, "zero-pad tail too short"

    vmem_limit = _pick_vmem_limit()
    Bt = _pick_block_batch(B, C, HW, vmem_limit)
    assert B % Bt == 0

    # column masks for the 7 horizontal tap offsets of the 'same' 7x7 conv
    j = np.arange(HW) % W
    masks = np.stack(
        [((j >= max(0, 3 - kw)) & (j < min(W, W + 3 - kw))).astype(np.float32)
         for kw in range(7)], axis=0)                        # (7, HW)

    # per-sublane spatial-conv weights: rows [mean maps of block | max maps]
    w_cols = jnp.concatenate(
        [jnp.broadcast_to(w_sp[0].reshape(1, 49), (Bt, 49)),
         jnp.broadcast_to(w_sp[1].reshape(1, 49), (Bt, 49))], axis=0)  # (2*Bt, 49)

    kernel = _make_cbam_kernel(H, W, L, Bt, use_roll=_roll_matches_numpy())

    x_flat = x_nchw.reshape(B, C, HW)                        # free minor-dim merge
    out_flat = pl.pallas_call(
        kernel,
        out_shape=jax.ShapeDtypeStruct((B, C, HW), jnp.float32),
        grid=(B // Bt,),
        in_specs=[
            pl.BlockSpec((Bt, C, HW), lambda g: (g, 0, 0)),
            pl.BlockSpec((hidden, C), lambda g: (0, 0)),
            pl.BlockSpec((C, hidden), lambda g: (0, 0)),
            pl.BlockSpec((2 * Bt, 49), lambda g: (0, 0)),
            pl.BlockSpec((7, HW), lambda g: (0, 0)),
        ],
        out_specs=pl.BlockSpec((Bt, C, HW), lambda g: (g, 0, 0)),
        compiler_params=pltpu.CompilerParams(
            dimension_semantics=("parallel",),
            vmem_limit_bytes=vmem_limit),
    )(x_flat, w1, w2, w_cols, jnp.asarray(masks))
    return out_flat.reshape(B, C, H, W)


# ----------------------------------------------------------------------------
# Pure-JAX reference (same math, XLA ops) for correctness checking
# ----------------------------------------------------------------------------
def cbam_ref(x_nchw, w1, w2, w_sp):
    x = jnp.transpose(x_nchw, (0, 2, 3, 1))                  # NHWC
    avg = jnp.mean(x, axis=(1, 2))                           # (B, C)
    mx = jnp.max(x, axis=(1, 2))                             # (B, C)

    def mlp(v):                                              # v: (B, C)
        return jnp.maximum(v @ w1.T, 0.0) @ w2.T

    scale = jax.nn.sigmoid(mlp(avg) + mlp(mx))               # (B, C)
    f1 = x * scale[:, None, None, :]
    stats = jnp.stack([jnp.mean(f1, axis=-1), jnp.max(f1, axis=-1)], axis=-1)
    w_hwio = jnp.transpose(w_sp, (1, 2, 0))[:, :, :, None]   # (7,7,2,1)
    conv = lax.conv_general_dilated(
        stats, w_hwio, window_strides=(1, 1), padding="SAME",
        dimension_numbers=("NHWC", "HWIO", "NHWC"))
    att = jax.nn.sigmoid(conv)                               # (B, H, W, 1)
    return jnp.transpose(f1 * att, (0, 3, 1, 2))             # NCHW


if __name__ == "__main__":
    B, C, H, W = 2, 32, 16, 16
    ratio = 16
    hidden = C // ratio                                      # = 2

    key = jax.random.PRNGKey(0)
    kx, k1, k2, k3 = jax.random.split(key, 4)
    x_nchw = jax.random.normal(kx, (B, C, H, W), jnp.float32)
    # Deterministic synthetic parameters (PyTorch weight orientations).
    w1 = jax.random.normal(k1, (hidden, C), jnp.float32) * 0.1   # conv1 1x1 (C -> hidden)
    w2 = jax.random.normal(k2, (C, hidden), jnp.float32) * 0.1   # conv2 1x1 (hidden -> C)
    w_sp = jax.random.normal(k3, (2, 7, 7), jnp.float32) * 0.1   # spatial 7x7 conv (2 -> 1)

    out = jax.block_until_ready(cbam(x_nchw, w1, w2, w_sp))
    ref = jax.block_until_ready(cbam_ref(x_nchw, w1, w2, w_sp))

    assert out.shape == (B, C, H, W)
    assert jnp.allclose(out, ref, atol=2e-4, rtol=2e-4), "mismatch vs reference"
    print("KERNEL_OK")
</pallas_src>

<mosaic_0001>
module attributes {stable_mosaic.version = 11 : i64} {
  func.func @probe(%arg0: memref<8x128xf32, #tpu.memory_space<vmem>>, %arg1: memref<8x128xf32, #tpu.memory_space<vmem>>) attributes {dimension_semantics = [], scalar_prefetch = 0 : i64, scratch_operands = 0 : i64, tpu.core_type = #tpu.core_type<tc>} {
    %c0 = arith.constant 0 : index
    %c0_0 = arith.constant 0 : index
    %0 = vector.load %arg0[%c0, %c0_0] : memref<8x128xf32, #tpu.memory_space<vmem>>, vector<8x128xf32>
    %c1_i32 = arith.constant 1 : i32
    %1 = tpu.dynamic_rotate %0 by %c1_i32 dim 1 : vector<8x128xf32>, i32 -> vector<8x128xf32>
    %c0_1 = arith.constant 0 : index
    %c0_2 = arith.constant 0 : index
    %2 = vector.load %arg1[%c0_1, %c0_2] : memref<8x128xf32, #tpu.memory_space<vmem>>, vector<8x128xf32>
    tpu.vector_store %arg1[%c0_1, %c0_2], %1 {strides = array<i32>} : memref<8x128xf32, #tpu.memory_space<vmem>>, vector<8x128xf32>,
    return
  }
}

module attributes {stable_mosaic.version = 11 : i64} {
  func.func @kernel(%arg0: i32, %arg1: memref<1x32x256xf32, #tpu.memory_space<vmem>>, %arg2: memref<2x32xf32, #tpu.memory_space<vmem>>, %arg3: memref<32x2xf32, #tpu.memory_space<vmem>>, %arg4: memref<2x49xf32, #tpu.memory_space<vmem>>, %arg5: memref<7x256xf32, #tpu.memory_space<vmem>>, %arg6: memref<1x32x256xf32, #tpu.memory_space<vmem>>) attributes {dimension_semantics = [#tpu.dimension_semantics<parallel>], iteration_bounds = array<i64: 2>, scalar_prefetch = 0 : i64, scratch_operands = 0 : i64, tpu.core_type = #tpu.core_type<tc>, window_params = [{transform_indices = @transform_0, window_bounds = array<i64: 1, 32, 256>}, {pipeline_mode = #tpu.pipeline_mode<synchronous>, transform_indices = @transform_1, window_bounds = array<i64: 2, 32>}, {pipeline_mode = #tpu.pipeline_mode<synchronous>, transform_indices = @transform_2, window_bounds = array<i64: 32, 2>}, {pipeline_mode = #tpu.pipeline_mode<synchronous>, transform_indices = @transform_3, window_bounds = array<i64: 2, 49>}, {pipeline_mode = #tpu.pipeline_mode<synchronous>, transform_indices = @transform_4, window_bounds = array<i64: 7, 256>}, {transform_indices = @transform_5, window_bounds = array<i64: 1, 32, 256>}]} {
    %c0 = arith.constant 0 : index
    %c0_0 = arith.constant 0 : index
    %c0_1 = arith.constant 0 : index
    %0 = vector.load %arg1[%c0, %c0_0, %c0_1] : memref<1x32x256xf32, #tpu.memory_space<vmem>>, vector<1x32x256xf32>
    %1 = vector.shape_cast %0 : vector<1x32x256xf32> to vector<32x256xf32>
    %cst = arith.constant dense<0.000000e+00> : vector<32xf32>
    %2 = vector.multi_reduction <add>, %1, %cst [1] : vector<32x256xf32> to vector<32xf32>
    %3 = vector.shape_cast %2 : vector<32xf32> to vector<32x1xf32>
    %cst_2 = arith.constant 2.560000e+02 : f32
    %4 = vector.broadcast %cst_2 : f32 to vector<32x1xf32>
    %5 = arith.divf %3, %4 : vector<32x1xf32>
    %cst_3 = arith.constant dense<0xFF800000> : vector<32xf32>
    %6 = vector.multi_reduction <maximumf>, %1, %cst_3 [1] : vector<32x256xf32> to vector<32xf32>
    %7 = vector.shape_cast %6 : vector<32xf32> to vector<32x1xf32>
    %8 = tpu.concatenate %5, %7 in 1 : vector<32x1xf32>, vector<32x1xf32> -> vector<32x2xf32>
    %c0_4 = arith.constant 0 : index
    %c0_5 = arith.constant 0 : index
    %9 = vector.load %arg2[%c0_4, %c0_5] : memref<2x32xf32, #tpu.memory_space<vmem>>, vector<2x32xf32>
    %cst_6 = arith.constant dense<0.000000e+00> : vector<2x2xf32>
    %10 = tpu.matmul %9, %8, %cst_6 {dimension_numbers = #tpu.dot_dimension_numbers<[1], [0], [0], [1], [0, 0, 1, 1], [], []>} : vector<2x32xf32>, vector<32x2xf32>, vector<2x2xf32> -> vector<2x2xf32>
    %cst_7 = arith.constant 0.000000e+00 : f32
    %11 = vector.broadcast %cst_7 : f32 to vector<2x2xf32>
    %12 = arith.maximumf %10, %11 : vector<2x2xf32>
    %c0_8 = arith.constant 0 : index
    %c0_9 = arith.constant 0 : index
    %13 = vector.load %arg3[%c0_8, %c0_9] : memref<32x2xf32, #tpu.memory_space<vmem>>, vector<32x2xf32>
    %cst_10 = arith.constant dense<0.000000e+00> : vector<32x2xf32>
    %14 = tpu.matmul %13, %12, %cst_10 {dimension_numbers = #tpu.dot_dimension_numbers<[1], [0], [0], [1], [0, 0, 1, 1], [], []>} : vector<32x2xf32>, vector<2x2xf32>, vector<32x2xf32> -> vector<32x2xf32>
    %15 = vector.extract_strided_slice %14 {offsets = [0, 0], sizes = [32, 1], strides = [1, 1]} : vector<32x2xf32> to vector<32x1xf32>
    %16 = vector.extract_strided_slice %14 {offsets = [0, 1], sizes = [32, 1], strides = [1, 1]} : vector<32x2xf32> to vector<32x1xf32>
    %17 = arith.addf %15, %16 : vector<32x1xf32>
    %18 = arith.negf %17 : vector<32x1xf32>
    %19 = math.exp %18 : vector<32x1xf32>
    %cst_11 = arith.constant 1.000000e+00 : f32
    %20 = vector.broadcast %cst_11 : f32 to vector<32x1xf32>
    %21 = arith.addf %20, %19 : vector<32x1xf32>
    %22 = arith.divf %20, %21 : vector<32x1xf32>
    %c0_12 = arith.constant 0 : index
    %c0_13 = arith.constant 0 : index
    %c0_14 = arith.constant 0 : index
    %23 = vector.load %arg1[%c0_12, %c0_13, %c0_14] : memref<1x32x256xf32, #tpu.memory_space<vmem>>, vector<1x32x256xf32>
    %24 = vector.shape_cast %23 : vector<1x32x256xf32> to vector<32x256xf32>
    %25 = vector.broadcast %22 : vector<32x1xf32> to vector<32x256xf32>
    %26 = arith.mulf %24, %25 : vector<32x256xf32>
    %cst_15 = arith.constant dense<0.000000e+00> : vector<256xf32>
    %27 = vector.multi_reduction <add>, %26, %cst_15 [0] : vector<32x256xf32> to vector<256xf32>
    %28 = vector.shape_cast %27 : vector<256xf32> to vector<1x256xf32>
    %cst_16 = arith.constant 3.200000e+01 : f32
    %29 = vector.broadcast %cst_16 : f32 to vector<1x256xf32>
    %30 = arith.divf %28, %29 : vector<1x256xf32>
    %cst_17 = arith.constant dense<0xFF800000> : vector<256xf32>
    %31 = vector.multi_reduction <maximumf>, %26, %cst_17 [0] : vector<32x256xf32> to vector<256xf32>
    %32 = vector.shape_cast %31 : vector<256xf32> to vector<1x256xf32>
    %33 = tpu.concatenate %30, %32 in 0 : vector<1x256xf32>, vector<1x256xf32> -> vector<2x256xf32>
    %cst_18 = arith.constant 0.000000e+00 : f32
    %34 = vector.broadcast %cst_18 : f32 to vector<2x48xf32>
    %cst_19 = arith.constant 0.000000e+00 : f32
    %35 = vector.broadcast %cst_19 : f32 to vector<2x80xf32>
    %36 = tpu.concatenate %34, %33, %35 in 1 : vector<2x48xf32>, vector<2x256xf32>, vector<2x80xf32> -> vector<2x384xf32>
    %37 = vector.extract_strided_slice %36 {offsets = [0, 16], sizes = [2, 368], strides = [1, 1]} : vector<2x384xf32> to vector<2x368xf32>
    %38 = vector.extract_strided_slice %36 {offsets = [0, 0], sizes = [2, 16], strides = [1, 1]} : vector<2x384xf32> to vector<2x16xf32>
    %39 = tpu.concatenate %37, %38 in 1 : vector<2x368xf32>, vector<2x16xf32> -> vector<2x384xf32>
    %40 = vector.extract_strided_slice %36 {offsets = [0, 32], sizes = [2, 352], strides = [1, 1]} : vector<2x384xf32> to vector<2x352xf32>
    %41 = vector.extract_strided_slice %36 {offsets = [0, 0], sizes = [2, 32], strides = [1, 1]} : vector<2x384xf32> to vector<2x32xf32>
    %42 = tpu.concatenate %40, %41 in 1 : vector<2x352xf32>, vector<2x32xf32> -> vector<2x384xf32>
    %43 = vector.extract_strided_slice %36 {offsets = [0, 48], sizes = [2, 336], strides = [1, 1]} : vector<2x384xf32> to vector<2x336xf32>
    %44 = vector.extract_strided_slice %36 {offsets = [0, 0], sizes = [2, 48], strides = [1, 1]} : vector<2x384xf32> to vector<2x48xf32>
    %45 = tpu.concatenate %43, %44 in 1 : vector<2x336xf32>, vector<2x48xf32> -> vector<2x384xf32>
    %46 = vector.extract_strided_slice %36 {offsets = [0, 64], sizes = [2, 320], strides = [1, 1]} : vector<2x384xf32> to vector<2x320xf32>
    %47 = vector.extract_strided_slice %36 {offsets = [0, 0], sizes = [2, 64], strides = [1, 1]} : vector<2x384xf32> to vector<2x64xf32>
    %48 = tpu.concatenate %46, %47 in 1 : vector<2x320xf32>, vector<2x64xf32> -> vector<2x384xf32>
    %49 = vector.extract_strided_slice %36 {offsets = [0, 80], sizes = [2, 304], strides = [1, 1]} : vector<2x384xf32> to vector<2x304xf32>
    %50 = vector.extract_strided_slice %36 {offsets = [0, 0], sizes = [2, 80], strides = [1, 1]} : vector<2x384xf32> to vector<2x80xf32>
    %51 = tpu.concatenate %49, %50 in 1 : vector<2x304xf32>, vector<2x80xf32> -> vector<2x384xf32>
    %52 = vector.extract_strided_slice %36 {offsets = [0, 96], sizes = [2, 288], strides = [1, 1]} : vector<2x384xf32> to vector<2x288xf32>
    %53 = vector.extract_strided_slice %36 {offsets = [0, 0], sizes = [2, 96], strides = [1, 1]} : vector<2x384xf32> to vector<2x96xf32>
    %54 = tpu.concatenate %52, %53 in 1 : vector<2x288xf32>, vector<2x96xf32> -> vector<2x384xf32>
    %c0_20 = arith.constant 0 : index
    %c0_21 = arith.constant 0 : index
    %55 = vector.load %arg4[%c0_20, %c0_21] : memref<2x49xf32, #tpu.memory_space<vmem>>, vector<2x49xf32>
    %c0_22 = arith.constant 0 : index
    %c0_23 = arith.constant 0 : index
    %56 = vector.load %arg5[%c0_22, %c0_23] : memref<7x256xf32, #tpu.memory_space<vmem>>, vector<7x256xf32>
    %57 = vector.extract_strided_slice %55 {offsets = [0, 0], sizes = [2, 1], strides = [1, 1]} : vector<2x49xf32> to vector<2x1xf32>
    %58 = vector.broadcast %57 : vector<2x1xf32> to vector<2x384xf32>
    %59 = arith.mulf %58, %36 : vector<2x384xf32>
    %60 = vector.extract_strided_slice %55 {offsets = [0, 7], sizes = [2, 1], strides = [1, 1]} : vector<2x49xf32> to vector<2x1xf32>
    %61 = vector.broadcast %60 : vector<2x1xf32> to vector<2x384xf32>
    %62 = arith.mulf %61, %39 : vector<2x384xf32>
    %63 = arith.addf %59, %62 : vector<2x384xf32>
    %64 = vector.extract_strided_slice %55 {offsets = [0, 14], sizes = [2, 1], strides = [1, 1]} : vector<2x49xf32> to vector<2x1xf32>
    %65 = vector.broadcast %64 : vector<2x1xf32> to vector<2x384xf32>
    %66 = arith.mulf %65, %42 : vector<2x384xf32>
    %67 = arith.addf %63, %66 : vector<2x384xf32>
    %68 = vector.extract_strided_slice %55 {offsets = [0, 21], sizes = [2, 1], strides = [1, 1]} : vector<2x49xf32> to vector<2x1xf32>
    %69 = vector.broadcast %68 : vector<2x1xf32> to vector<2x384xf32>
    %70 = arith.mulf %69, %45 : vector<2x384xf32>
    %71 = arith.addf %67, %70 : vector<2x384xf32>
    %72 = vector.extract_strided_slice %55 {offsets = [0, 28], sizes = [2, 1], strides = [1, 1]} : vector<2x49xf32> to vector<2x1xf32>
    %73 = vector.broadcast %72 : vector<2x1xf32> to vector<2x384xf32>
    %74 = arith.mulf %73, %48 : vector<2x384xf32>
    %75 = arith.addf %71, %74 : vector<2x384xf32>
    %76 = vector.extract_strided_slice %55 {offsets = [0, 35], sizes = [2, 1], strides = [1, 1]} : vector<2x49xf32> to vector<2x1xf32>
    %77 = vector.broadcast %76 : vector<2x1xf32> to vector<2x384xf32>
    %78 = arith.mulf %77, %51 : vector<2x384xf32>
    %79 = arith.addf %75, %78 : vector<2x384xf32>
    %80 = vector.extract_strided_slice %55 {offsets = [0, 42], sizes = [2, 1], strides = [1, 1]} : vector<2x49xf32> to vector<2x1xf32>
    %81 = vector.broadcast %80 : vector<2x1xf32> to vector<2x384xf32>
    %82 = arith.mulf %81, %54 : vector<2x384xf32>
    %83 = arith.addf %79, %82 : vector<2x384xf32>
    %84 = vector.extract_strided_slice %83 {offsets = [0, 381], sizes = [2, 3], strides = [1, 1]} : vector<2x384xf32> to vector<2x3xf32>
    %85 = vector.extract_strided_slice %83 {offsets = [0, 0], sizes = [2, 381], strides = [1, 1]} : vector<2x384xf32> to vector<2x381xf32>
    %86 = tpu.concatenate %84, %85 in 1 : vector<2x3xf32>, vector<2x381xf32> -> vector<2x384xf32>
    %87 = vector.extract_strided_slice %86 {offsets = [0, 0], sizes = [2, 256], strides = [1, 1]} : vector<2x384xf32> to vector<2x256xf32>
    %88 = vector.extract_strided_slice %56 {offsets = [0, 0], sizes = [1, 256], strides = [1, 1]} : vector<7x256xf32> to vector<1x256xf32>
    %89 = vector.broadcast %88 : vector<1x256xf32> to vector<2x256xf32>
    %90 = arith.mulf %87, %89 : vector<2x256xf32>
    %91 = vector.extract_strided_slice %55 {offsets = [0, 1], sizes = [2, 1], strides = [1, 1]} : vector<2x49xf32> to vector<2x1xf32>
    %92 = vector.broadcast %91 : vector<2x1xf32> to vector<2x384xf32>
    %93 = arith.mulf %92, %36 : vector<2x384xf32>
    %94 = vector.extract_strided_slice %55 {offsets = [0, 8], sizes = [2, 1], strides = [1, 1]} : vector<2x49xf32> to vector<2x1xf32>
    %95 = vector.broadcast %94 : vector<2x1xf32> to vector<2x384xf32>
    %96 = arith.mulf %95, %39 : vector<2x384xf32>
    %97 = arith.addf %93, %96 : vector<2x384xf32>
    %98 = vector.extract_strided_slice %55 {offsets = [0, 15], sizes = [2, 1], strides = [1, 1]} : vector<2x49xf32> to vector<2x1xf32>
    %99 = vector.broadcast %98 : vector<2x1xf32> to vector<2x384xf32>
    %100 = arith.mulf %99, %42 : vector<2x384xf32>
    %101 = arith.addf %97, %100 : vector<2x384xf32>
    %102 = vector.extract_strided_slice %55 {offsets = [0, 22], sizes = [2, 1], strides = [1, 1]} : vector<2x49xf32> to vector<2x1xf32>
    %103 = vector.broadcast %102 : vector<2x1xf32> to vector<2x384xf32>
    %104 = arith.mulf %103, %45 : vector<2x384xf32>
    %105 = arith.addf %101, %104 : vector<2x384xf32>
    %106 = vector.extract_strided_slice %55 {offsets = [0, 29], sizes = [2, 1], strides = [1, 1]} : vector<2x49xf32> to vector<2x1xf32>
    %107 = vector.broadcast %106 : vector<2x1xf32> to vector<2x384xf32>
    %108 = arith.mulf %107, %48 : vector<2x384xf32>
    %109 = arith.addf %105, %108 : vector<2x384xf32>
    %110 = vector.extract_strided_slice %55 {offsets = [0, 36], sizes = [2, 1], strides = [1, 1]} : vector<2x49xf32> to vector<2x1xf32>
    %111 = vector.broadcast %110 : vector<2x1xf32> to vector<2x384xf32>
    %112 = arith.mulf %111, %51 : vector<2x384xf32>
    %113 = arith.addf %109, %112 : vector<2x384xf32>
    %114 = vector.extract_strided_slice %55 {offsets = [0, 43], sizes = [2, 1], strides = [1, 1]} : vector<2x49xf32> to vector<2x1xf32>
    %115 = vector.broadcast %114 : vector<2x1xf32> to vector<2x384xf32>
    %116 = arith.mulf %115, %54 : vector<2x384xf32>
    %117 = arith.addf %113, %116 : vector<2x384xf32>
    %118 = vector.extract_strided_slice %117 {offsets = [0, 382], sizes = [2, 2], strides = [1, 1]} : vector<2x384xf32> to vector<2x2xf32>
    %119 = vector.extract_strided_slice %117 {offsets = [0, 0], sizes = [2, 382], strides = [1, 1]} : vector<2x384xf32> to vector<2x382xf32>
    %120 = tpu.concatenate %118, %119 in 1 : vector<2x2xf32>, vector<2x382xf32> -> vector<2x384xf32>
    %121 = vector.extract_strided_slice %120 {offsets = [0, 0], sizes = [2, 256], strides = [1, 1]} : vector<2x384xf32> to vector<2x256xf32>
    %122 = vector.extract_strided_slice %56 {offsets = [1, 0], sizes = [1, 256], strides = [1, 1]} : vector<7x256xf32> to vector<1x256xf32>
    %123 = vector.broadcast %122 : vector<1x256xf32> to vector<2x256xf32>
    %124 = arith.mulf %121, %123 : vector<2x256xf32>
    %125 = arith.addf %90, %124 : vector<2x256xf32>
    %126 = vector.extract_strided_slice %55 {offsets = [0, 2], sizes = [2, 1], strides = [1, 1]} : vector<2x49xf32> to vector<2x1xf32>
    %127 = vector.broadcast %126 : vector<2x1xf32> to vector<2x384xf32>
    %128 = arith.mulf %127, %36 : vector<2x384xf32>
    %129 = vector.extract_strided_slice %55 {offsets = [0, 9], sizes = [2, 1], strides = [1, 1]} : vector<2x49xf32> to vector<2x1xf32>
    %130 = vector.broadcast %129 : vector<2x1xf32> to vector<2x384xf32>
    %131 = arith.mulf %130, %39 : vector<2x384xf32>
    %132 = arith.addf %128, %131 : vector<2x384xf32>
    %133 = vector.extract_strided_slice %55 {offsets = [0, 16], sizes = [2, 1], strides = [1, 1]} : vector<2x49xf32> to vector<2x1xf32>
    %134 = vector.broadcast %133 : vector<2x1xf32> to vector<2x384xf32>
    %135 = arith.mulf %134, %42 : vector<2x384xf32>
    %136 = arith.addf %132, %135 : vector<2x384xf32>
    %137 = vector.extract_strided_slice %55 {offsets = [0, 23], sizes = [2, 1], strides = [1, 1]} : vector<2x49xf32> to vector<2x1xf32>
    %138 = vector.broadcast %137 : vector<2x1xf32> to vector<2x384xf32>
    %139 = arith.mulf %138, %45 : vector<2x384xf32>
    %140 = arith.addf %136, %139 : vector<2x384xf32>
    %141 = vector.extract_strided_slice %55 {offsets = [0, 30], sizes = [2, 1], strides = [1, 1]} : vector<2x49xf32> to vector<2x1xf32>
    %142 = vector.broadcast %141 : vector<2x1xf32> to vector<2x384xf32>
    %143 = arith.mulf %142, %48 : vector<2x384xf32>
    %144 = arith.addf %140, %143 : vector<2x384xf32>
    %145 = vector.extract_strided_slice %55 {offsets = [0, 37], sizes = [2, 1], strides = [1, 1]} : vector<2x49xf32> to vector<2x1xf32>
    %146 = vector.broadcast %145 : vector<2x1xf32> to vector<2x384xf32>
    %147 = arith.mulf %146, %51 : vector<2x384xf32>
    %148 = arith.addf %144, %147 : vector<2x384xf32>
    %149 = vector.extract_strided_slice %55 {offsets = [0, 44], sizes = [2, 1], strides = [1, 1]} : vector<2x49xf32> to vector<2x1xf32>
    %150 = vector.broadcast %149 : vector<2x1xf32> to vector<2x384xf32>
    %151 = arith.mulf %150, %54 : vector<2x384xf32>
    %152 = arith.addf %148, %151 : vector<2x384xf32>
    %153 = vector.extract_strided_slice %152 {offsets = [0, 383], sizes = [2, 1], strides = [1, 1]} : vector<2x384xf32> to vector<2x1xf32>
    %154 = vector.extract_strided_slice %152 {offsets = [0, 0], sizes = [2, 383], strides = [1, 1]} : vector<2x384xf32> to vector<2x383xf32>
    %155 = tpu.concatenate %153, %154 in 1 : vector<2x1xf32>, vector<2x383xf32> -> vector<2x384xf32>
    %156 = vector.extract_strided_slice %155 {offsets = [0, 0], sizes = [2, 256], strides = [1, 1]} : vector<2x384xf32> to vector<2x256xf32>
    %157 = vector.extract_strided_slice %56 {offsets = [2, 0], sizes = [1, 256], strides = [1, 1]} : vector<7x256xf32> to vector<1x256xf32>
    %158 = vector.broadcast %157 : vector<1x256xf32> to vector<2x256xf32>
    %159 = arith.mulf %156, %158 : vector<2x256xf32>
    %160 = arith.addf %125, %159 : vector<2x256xf32>
    %161 = vector.extract_strided_slice %55 {offsets = [0, 3], sizes = [2, 1], strides = [1, 1]} : vector<2x49xf32> to vector<2x1xf32>
    %162 = vector.broadcast %161 : vector<2x1xf32> to vector<2x384xf32>
    %163 = arith.mulf %162, %36 : vector<2x384xf32>
    %164 = vector.extract_strided_slice %55 {offsets = [0, 10], sizes = [2, 1], strides = [1, 1]} : vector<2x49xf32> to vector<2x1xf32>
    %165 = vector.broadcast %164 : vector<2x1xf32> to vector<2x384xf32>
    %166 = arith.mulf %165, %39 : vector<2x384xf32>
    %167 = arith.addf %163, %166 : vector<2x384xf32>
    %168 = vector.extract_strided_slice %55 {offsets = [0, 17], sizes = [2, 1], strides = [1, 1]} : vector<2x49xf32> to vector<2x1xf32>
    %169 = vector.broadcast %168 : vector<2x1xf32> to vector<2x384xf32>
    %170 = arith.mulf %169, %42 : vector<2x384xf32>
    %171 = arith.addf %167, %170 : vector<2x384xf32>
    %172 = vector.extract_strided_slice %55 {offsets = [0, 24], sizes = [2, 1], strides = [1, 1]} : vector<2x49xf32> to vector<2x1xf32>
    %173 = vector.broadcast %172 : vector<2x1xf32> to vector<2x384xf32>
    %174 = arith.mulf %173, %45 : vector<2x384xf32>
    %175 = arith.addf %171, %174 : vector<2x384xf32>
    %176 = vector.extract_strided_slice %55 {offsets = [0, 31], sizes = [2, 1], strides = [1, 1]} : vector<2x49xf32> to vector<2x1xf32>
    %177 = vector.broadcast %176 : vector<2x1xf32> to vector<2x384xf32>
    %178 = arith.mulf %177, %48 : vector<2x384xf32>
    %179 = arith.addf %175, %178 : vector<2x384xf32>
    %180 = vector.extract_strided_slice %55 {offsets = [0, 38], sizes = [2, 1], strides = [1, 1]} : vector<2x49xf32> to vector<2x1xf32>
    %181 = vector.broadcast %180 : vector<2x1xf32> to vector<2x384xf32>
    %182 = arith.mulf %181, %51 : vector<2x384xf32>
    %183 = arith.addf %179, %182 : vector<2x384xf32>
    %184 = vector.extract_strided_slice %55 {offsets = [0, 45], sizes = [2, 1], strides = [1, 1]} : vector<2x49xf32> to vector<2x1xf32>
    %185 = vector.broadcast %184 : vector<2x1xf32> to vector<2x384xf32>
    %186 = arith.mulf %185, %54 : vector<2x384xf32>
    %187 = arith.addf %183, %186 : vector<2x384xf32>
    %188 = vector.extract_strided_slice %187 {offsets = [0, 0], sizes = [2, 256], strides = [1, 1]} : vector<2x384xf32> to vector<2x256xf32>
    %189 = arith.addf %160, %188 : vector<2x256xf32>
    %190 = vector.extract_strided_slice %55 {offsets = [0, 4], sizes = [2, 1], strides = [1, 1]} : vector<2x49xf32> to vector<2x1xf32>
    %191 = vector.broadcast %190 : vector<2x1xf32> to vector<2x384xf32>
    %192 = arith.mulf %191, %36 : vector<2x384xf32>
    %193 = vector.extract_strided_slice %55 {offsets = [0, 11], sizes = [2, 1], strides = [1, 1]} : vector<2x49xf32> to vector<2x1xf32>
    %194 = vector.broadcast %193 : vector<2x1xf32> to vector<2x384xf32>
    %195 = arith.mulf %194, %39 : vector<2x384xf32>
    %196 = arith.addf %192, %195 : vector<2x384xf32>
    %197 = vector.extract_strided_slice %55 {offsets = [0, 18], sizes = [2, 1], strides = [1, 1]} : vector<2x49xf32> to vector<2x1xf32>
    %198 = vector.broadcast %197 : vector<2x1xf32> to vector<2x384xf32>
    %199 = arith.mulf %198, %42 : vector<2x384xf32>
    %200 = arith.addf %196, %199 : vector<2x384xf32>
    %201 = vector.extract_strided_slice %55 {offsets = [0, 25], sizes = [2, 1], strides = [1, 1]} : vector<2x49xf32> to vector<2x1xf32>
    %202 = vector.broadcast %201 : vector<2x1xf32> to vector<2x384xf32>
    %203 = arith.mulf %202, %45 : vector<2x384xf32>
    %204 = arith.addf %200, %203 : vector<2x384xf32>
    %205 = vector.extract_strided_slice %55 {offsets = [0, 32], sizes = [2, 1], strides = [1, 1]} : vector<2x49xf32> to vector<2x1xf32>
    %206 = vector.broadcast %205 : vector<2x1xf32> to vector<2x384xf32>
    %207 = arith.mulf %206, %48 : vector<2x384xf32>
    %208 = arith.addf %204, %207 : vector<2x384xf32>
    %209 = vector.extract_strided_slice %55 {offsets = [0, 39], sizes = [2, 1], strides = [1, 1]} : vector<2x49xf32> to vector<2x1xf32>
    %210 = vector.broadcast %209 : vector<2x1xf32> to vector<2x384xf32>
    %211 = arith.mulf %210, %51 : vector<2x384xf32>
    %212 = arith.addf %208, %211 : vector<2x384xf32>
    %213 = vector.extract_strided_slice %55 {offsets = [0, 46], sizes = [2, 1], strides = [1, 1]} : vector<2x49xf32> to vector<2x1xf32>
    %214 = vector.broadcast %213 : vector<2x1xf32> to vector<2x384xf32>
    %215 = arith.mulf %214, %54 : vector<2x384xf32>
    %216 = arith.addf %212, %215 : vector<2x384xf32>
    %217 = vector.extract_strided_slice %216 {offsets = [0, 1], sizes = [2, 383], strides = [1, 1]} : vector<2x384xf32> to vector<2x383xf32>
    %218 = vector.extract_strided_slice %216 {offsets = [0, 0], sizes = [2, 1], strides = [1, 1]} : vector<2x384xf32> to vector<2x1xf32>
    %219 = tpu.concatenate %217, %218 in 1 : vector<2x383xf32>, vector<2x1xf32> -> vector<2x384xf32>
    %220 = vector.extract_strided_slice %219 {offsets = [0, 0], sizes = [2, 256], strides = [1, 1]} : vector<2x384xf32> to vector<2x256xf32>
    %221 = vector.extract_strided_slice %56 {offsets = [4, 0], sizes = [1, 256], strides = [1, 1]} : vector<7x256xf32> to vector<1x256xf32>
    %222 = vector.broadcast %221 : vector<1x256xf32> to vector<2x256xf32>
    %223 = arith.mulf %220, %222 : vector<2x256xf32>
    %224 = arith.addf %189, %223 : vector<2x256xf32>
    %225 = vector.extract_strided_slice %55 {offsets = [0, 5], sizes = [2, 1], strides = [1, 1]} : vector<2x49xf32> to vector<2x1xf32>
    %226 = vector.broadcast %225 : vector<2x1xf32> to vector<2x384xf32>
    %227 = arith.mulf %226, %36 : vector<2x384xf32>
    %228 = vector.extract_strided_slice %55 {offsets = [0, 12], sizes = [2, 1], strides = [1, 1]} : vector<2x49xf32> to vector<2x1xf32>
    %229 = vector.broadcast %228 : vector<2x1xf32> to vector<2x384xf32>
    %230 = arith.mulf %229, %39 : vector<2x384xf32>
    %231 = arith.addf %227, %230 : vector<2x384xf32>
    %232 = vector.extract_strided_slice %55 {offsets = [0, 19], sizes = [2, 1], strides = [1, 1]} : vector<2x49xf32> to vector<2x1xf32>
    %233 = vector.broadcast %232 : vector<2x1xf32> to vector<2x384xf32>
    %234 = arith.mulf %233, %42 : vector<2x384xf32>
    %235 = arith.addf %231, %234 : vector<2x384xf32>
    %236 = vector.extract_strided_slice %55 {offsets = [0, 26], sizes = [2, 1], strides = [1, 1]} : vector<2x49xf32> to vector<2x1xf32>
    %237 = vector.broadcast %236 : vector<2x1xf32> to vector<2x384xf32>
    %238 = arith.mulf %237, %45 : vector<2x384xf32>
    %239 = arith.addf %235, %238 : vector<2x384xf32>
    %240 = vector.extract_strided_slice %55 {offsets = [0, 33], sizes = [2, 1], strides = [1, 1]} : vector<2x49xf32> to vector<2x1xf32>
    %241 = vector.broadcast %240 : vector<2x1xf32> to vector<2x384xf32>
    %242 = arith.mulf %241, %48 : vector<2x384xf32>
    %243 = arith.addf %239, %242 : vector<2x384xf32>
    %244 = vector.extract_strided_slice %55 {offsets = [0, 40], sizes = [2, 1], strides = [1, 1]} : vector<2x49xf32> to vector<2x1xf32>
    %245 = vector.broadcast %244 : vector<2x1xf32> to vector<2x384xf32>
    %246 = arith.mulf %245, %51 : vector<2x384xf32>
    %247 = arith.addf %243, %246 : vector<2x384xf32>
    %248 = vector.extract_strided_slice %55 {offsets = [0, 47], sizes = [2, 1], strides = [1, 1]} : vector<2x49xf32> to vector<2x1xf32>
    %249 = vector.broadcast %248 : vector<2x1xf32> to vector<2x384xf32>
    %250 = arith.mulf %249, %54 : vector<2x384xf32>
    %251 = arith.addf %247, %250 : vector<2x384xf32>
    %252 = vector.extract_strided_slice %251 {offsets = [0, 2], sizes = [2, 382], strides = [1, 1]} : vector<2x384xf32> to vector<2x382xf32>
    %253 = vector.extract_strided_slice %251 {offsets = [0, 0], sizes = [2, 2], strides = [1, 1]} : vector<2x384xf32> to vector<2x2xf32>
    %254 = tpu.concatenate %252, %253 in 1 : vector<2x382xf32>, vector<2x2xf32> -> vector<2x384xf32>
    %255 = vector.extract_strided_slice %254 {offsets = [0, 0], sizes = [2, 256], strides = [1, 1]} : vector<2x384xf32> to vector<2x256xf32>
    %256 = vector.extract_strided_slice %56 {offsets = [5, 0], sizes = [1, 256], strides = [1, 1]} : vector<7x256xf32> to vector<1x256xf32>
    %257 = vector.broadcast %256 : vector<1x256xf32> to vector<2x256xf32>
    %258 = arith.mulf %255, %257 : vector<2x256xf32>
    %259 = arith.addf %224, %258 : vector<2x256xf32>
    %260 = vector.extract_strided_slice %55 {offsets = [0, 6], sizes = [2, 1], strides = [1, 1]} : vector<2x49xf32> to vector<2x1xf32>
    %261 = vector.broadcast %260 : vector<2x1xf32> to vector<2x384xf32>
    %262 = arith.mulf %261, %36 : vector<2x384xf32>
    %263 = vector.extract_strided_slice %55 {offsets = [0, 13], sizes = [2, 1], strides = [1, 1]} : vector<2x49xf32> to vector<2x1xf32>
    %264 = vector.broadcast %263 : vector<2x1xf32> to vector<2x384xf32>
    %265 = arith.mulf %264, %39 : vector<2x384xf32>
    %266 = arith.addf %262, %265 : vector<2x384xf32>
    %267 = vector.extract_strided_slice %55 {offsets = [0, 20], sizes = [2, 1], strides = [1, 1]} : vector<2x49xf32> to vector<2x1xf32>
    %268 = vector.broadcast %267 : vector<2x1xf32> to vector<2x384xf32>
    %269 = arith.mulf %268, %42 : vector<2x384xf32>
    %270 = arith.addf %266, %269 : vector<2x384xf32>
    %271 = vector.extract_strided_slice %55 {offsets = [0, 27], sizes = [2, 1], strides = [1, 1]} : vector<2x49xf32> to vector<2x1xf32>
    %272 = vector.broadcast %271 : vector<2x1xf32> to vector<2x384xf32>
    %273 = arith.mulf %272, %45 : vector<2x384xf32>
    %274 = arith.addf %270, %273 : vector<2x384xf32>
    %275 = vector.extract_strided_slice %55 {offsets = [0, 34], sizes = [2, 1], strides = [1, 1]} : vector<2x49xf32> to vector<2x1xf32>
    %276 = vector.broadcast %275 : vector<2x1xf32> to vector<2x384xf32>
    %277 = arith.mulf %276, %48 : vector<2x384xf32>
    %278 = arith.addf %274, %277 : vector<2x384xf32>
    %279 = vector.extract_strided_slice %55 {offsets = [0, 41], sizes = [2, 1], strides = [1, 1]} : vector<2x49xf32> to vector<2x1xf32>
    %280 = vector.broadcast %279 : vector<2x1xf32> to vector<2x384xf32>
    %281 = arith.mulf %280, %51 : vector<2x384xf32>
    %282 = arith.addf %278, %281 : vector<2x384xf32>
    %283 = vector.extract_strided_slice %55 {offsets = [0, 48], sizes = [2, 1], strides = [1, 1]} : vector<2x49xf32> to vector<2x1xf32>
    %284 = vector.broadcast %283 : vector<2x1xf32> to vector<2x384xf32>
    %285 = arith.mulf %284, %54 : vector<2x384xf32>
    %286 = arith.addf %282, %285 : vector<2x384xf32>
    %287 = vector.extract_strided_slice %286 {offsets = [0, 3], sizes = [2, 381], strides = [1, 1]} : vector<2x384xf32> to vector<2x381xf32>
    %288 = vector.extract_strided_slice %286 {offsets = [0, 0], sizes = [2, 3], strides = [1, 1]} : vector<2x384xf32> to vector<2x3xf32>
    %289 = tpu.concatenate %287, %288 in 1 : vector<2x381xf32>, vector<2x3xf32> -> vector<2x384xf32>
    %290 = vector.extract_strided_slice %289 {offsets = [0, 0], sizes = [2, 256], strides = [1, 1]} : vector<2x384xf32> to vector<2x256xf32>
    %291 = vector.extract_strided_slice %56 {offsets = [6, 0], sizes = [1, 256], strides = [1, 1]} : vector<7x256xf32> to vector<1x256xf32>
    %292 = vector.broadcast %291 : vector<1x256xf32> to vector<2x256xf32>
    %293 = arith.mulf %290, %292 : vector<2x256xf32>
    %294 = arith.addf %259, %293 : vector<2x256xf32>
    %295 = vector.extract_strided_slice %294 {offsets = [0, 0], sizes = [1, 256], strides = [1, 1]} : vector<2x256xf32> to vector<1x256xf32>
    %296 = vector.extract_strided_slice %294 {offsets = [1, 0], sizes = [1, 256], strides = [1, 1]} : vector<2x256xf32> to vector<1x256xf32>
    %297 = arith.addf %295, %296 : vector<1x256xf32>
    %298 = arith.negf %297 : vector<1x256xf32>
    %299 = math.exp %298 : vector<1x256xf32>
    %cst_24 = arith.constant 1.000000e+00 : f32
    %300 = vector.broadcast %cst_24 : f32 to vector<1x256xf32>
    %301 = arith.addf %300, %299 : vector<1x256xf32>
    %302 = arith.divf %300, %301 : vector<1x256xf32>
    %c0_25 = arith.constant 0 : index
    %c0_26 = arith.constant 0 : index
    %c0_27 = arith.constant 0 : index
    %303 = vector.load %arg1[%c0_25, %c0_26, %c0_27] : memref<1x32x256xf32, #tpu.memory_space<vmem>>, vector<1x32x256xf32>
    %304 = vector.shape_cast %303 : vector<1x32x256xf32> to vector<32x256xf32>
    %305 = vector.broadcast %22 : vector<32x1xf32> to vector<32x256xf32>
    %306 = arith.mulf %304, %305 : vector<32x256xf32>
    %307 = vector.broadcast %302 : vector<1x256xf32> to vector<32x256xf32>
    %308 = arith.mulf %306, %307 : vector<32x256xf32>
    %c0_28 = arith.constant 0 : index
    %c0_29 = arith.constant 0 : index
    %c0_30 = arith.constant 0 : index
    %309 = vector.load %arg6[%c0_28, %c0_29, %c0_30] : memref<1x32x256xf32, #tpu.memory_space<vmem>>, vector<1x32x256xf32>
    %310 = vector.shape_cast %309 : vector<1x32x256xf32> to vector<32x256xf32>
    %311 = vector.shape_cast %308 : vector<32x256xf32> to vector<1x32x256xf32>
    tpu.vector_store %arg6[%c0_28, %c0_29, %c0_30], %311 {strides = array<i32>} : memref<1x32x256xf32, #tpu.memory_space<vmem>>, vector<1x32x256xf32>,
    return
  }
  func.func @transform_0(%arg0: i32) -> (i32, i32, i32) {
    %c0_i32 = arith.constant 0 : i32
    %c0_i32_0 = arith.constant 0 : i32
    %c0_i32_1 = arith.constant 0 : i32
    return %arg0, %c0_i32, %c0_i32_0 : i32, i32, i32
  }
  func.func @transform_1(%arg0: i32) -> (i32, i32) {
    %c0_i32 = arith.constant 0 : i32
    %c0_i32_0 = arith.constant 0 : i32
    %c0_i32_1 = arith.constant 0 : i32
    return %c0_i32, %c0_i32_0 : i32, i32
  }
  func.func @transform_2(%arg0: i32) -> (i32, i32) {
    %c0_i32 = arith.constant 0 : i32
    %c0_i32_0 = arith.constant 0 : i32
    %c0_i32_1 = arith.constant 0 : i32
    return %c0_i32, %c0_i32_0 : i32, i32
  }
  func.func @transform_3(%arg0: i32) -> (i32, i32) {
    %c0_i32 = arith.constant 0 : i32
    %c0_i32_0 = arith.constant 0 : i32
    %c0_i32_1 = arith.constant 0 : i32
    return %c0_i32, %c0_i32_0 : i32, i32
  }
  func.func @transform_4(%arg0: i32) -> (i32, i32) {
    %c0_i32 = arith.constant 0 : i32
    %c0_i32_0 = arith.constant 0 : i32
    %c0_i32_1 = arith.constant 0 : i32
    return %c0_i32, %c0_i32_0 : i32, i32
  }
  func.func @transform_5(%arg0: i32) -> (i32, i32, i32) {
    %c0_i32 = arith.constant 0 : i32
    %c0_i32_0 = arith.constant 0 : i32
    %c0_i32_1 = arith.constant 0 : i32
    return %arg0, %c0_i32, %c0_i32_0 : i32, i32, i32
  }
}

</mosaic_0001>

<llo_original>
// kernel: tpu_custom_call.1
$region0: #{tpu_custom_call.1}
  #allocation0 [shape = 'u32[]', space=smem, size = 0x4, offset = 0x4, fixed_abs, tag = 'smem constant byte address 0x4 - core index']
  #allocation1 [shape = 'u32[144,128]{1,0:T(1,128)}', space=vmem, size = 0x12000, scoped, tag = 'internal scratch']
  %s0 = inlined_call_operand.hbm [shape: f32[8,128], index: 0, kind: input, shape index: {}]
  %s1 = inlined_call_operand.hbm [shape: f32[8,128], index: 1, kind: output, shape index: {}]
  %s2 = sld [smem:[#allocation0]]
  $region18: #{tpu_custom_call.1} parent=0
    _
  %s4 = ssub.s32 1, %s2
  %s5 = scalar_select 0, %s4, %s2
  $region1: #{tpu_custom_call.1} parent=0
    #allocation2 [shape = 'u8[4096]{0}', space=vmem, size = 0x1000, scoped, tag = 'input window, operand 0, single buffered']
    #allocation3 [shape = 's32[1]{0}', space=sflag, size = 0x4, scoped, tag = 'scoped memory for tpu_custom_call.1']
    #allocation4 [shape = 's32[1]{0}', space=sflag, size = 0x4, scoped, tag = 'scoped memory for tpu_custom_call.1']
    #allocation5 [shape = 'u8[4096]{0}', space=vmem, size = 0x1000, scoped, tag = 'output window, operand 0, single buffered']
    %6 = vsyncpa [#allocation3], 0
    %7 = vsyncpa [#allocation4], 0
    // Predicated region
    $region2: #{tpu_custom_call.1} parent=1 // pred_check
      _
    $region3: #{tpu_custom_call.1} parent=1 // pred_check_branch
      %9 = sbr.rel (0) target = $region5
    $region4: #{tpu_custom_call.1} parent=1 // pred_region
      %s11 = ssub.s32 128, 128
      %12 = vsyncadd [#allocation3], %s11
      %s14 = sshll.u32 [#allocation2], 4
      %s15 = int_to_ptr.vmem [resolvable:$true] %s14
      %17 = dma.hbm_to_vmem [thread:$0]  %s0, 128, %s15, [#allocation3]
    $region5: #{tpu_custom_call.1} parent=1 // pred_fallthru
      _
    // Predicated region
    $region6: #{tpu_custom_call.1} parent=1 // pred_check
      _
    $region7: #{tpu_custom_call.1} parent=1 // pred_check_branch
      %19 = sbr.rel (0) target = $region9
    $region8: #{tpu_custom_call.1} parent=1 // pred_region
      %20 = dma.done [#allocation3], 128
    $region9: #{tpu_custom_call.1} parent=1 // pred_fallthru
      _
    %v21 = vld [vmem:[#allocation2] sm:$0xff]
    %22 = vrot.lane.b32.xlu0 %v21, 1
    %v23 = vpop.permute.xlu0 %22
    %24 = vst [vmem:[#allocation5] sm:$0xff] %v23
    // Predicated region
    $region10: #{tpu_custom_call.1} parent=1 // pred_check
      _
    $region11: #{tpu_custom_call.1} parent=1 // pred_check_branch
      %26 = sbr.rel (0) target = $region13
    $region12: #{tpu_custom_call.1} parent=1 // pred_region
      %s28 = ssub.s32 128, 128
      %29 = vsyncadd [#allocation4], %s28
      %s31 = sshll.u32 [#allocation5], 4
      %s32 = int_to_ptr.vmem [resolvable:$true] %s31
      %34 = dma.vmem_to_hbm [thread:$0]  %s32, 128, %s1, [#allocation4]
    $region13: #{tpu_custom_call.1} parent=1 // pred_fallthru
      _
    // Predicated region
    $region14: #{tpu_custom_call.1} parent=1 // pred_check
      _
    $region15: #{tpu_custom_call.1} parent=1 // pred_check_branch
      %36 = sbr.rel (0) target = $region17
    $region16: #{tpu_custom_call.1} parent=1 // pred_region
      %37 = dma.done [#allocation4], 128
    $region17: #{tpu_custom_call.1} parent=1 // pred_fallthru
      _
    %38 = vsyncpa [#allocation3], 1
    %39 = vsyncpa [#allocation4], 1

// kernel: tpu_custom_call.1
$region0: #{tpu_custom_call.1}
  #allocation0 [shape = 'u32[]', space=smem, size = 0x4, offset = 0x4, fixed_abs, tag = 'smem constant byte address 0x4 - core index']
  #allocation1 [shape = 'u32[144,128]{1,0:T(1,128)}', space=vmem, size = 0x12000, scoped, tag = 'internal scratch']
  %s0 = inlined_call_operand.hbm [shape: f32[2,32,256], index: 0, kind: input, shape index: {}]
  %s1 = inlined_call_operand.vmem [shape: f32[2,32], index: 1, kind: input, shape index: {}]
  %s2 = inlined_call_operand.vmem [shape: f32[32,2], index: 2, kind: input, shape index: {}]
  %s3 = inlined_call_operand.vmem [shape: f32[2,49], index: 3, kind: input, shape index: {}]
  %s4 = inlined_call_operand.vmem [shape: f32[7,256], index: 4, kind: input, shape index: {}]
  %s5 = inlined_call_operand.hbm [shape: f32[2,32,256], index: 5, kind: output, shape index: {}]
  %s6 = sld [smem:[#allocation0]]
  $region57: #{tpu_custom_call.1} parent=0
    _
  %s8 = ssub.s32 1, %s6
  %s9 = scalar_select 0, %s8, %s6
  $region1: #{tpu_custom_call.1} parent=0
    #allocation2 [shape = 'u8[65536]{0}', space=vmem, size = 0x10000, scoped, tag = 'input window, operand 0']
    #allocation3 [shape = 's32[2]{0}', space=sflag, size = 0x8, scoped, tag = 'scoped memory for tpu_custom_call.1']
    #allocation4 [shape = 's32[2]{0}', space=sflag, size = 0x8, scoped, tag = 'scoped memory for tpu_custom_call.1']
    #allocation5 [shape = 'u8[65536]{0}', space=vmem, size = 0x10000, scoped, tag = 'output window, operand 0']
    %10 = vsyncpa [#allocation3], 0
    %s11 = scalar_lea.sflag [#allocation3], 1
    %12 = vsyncpa %s11, 0
    %13 = vsyncpa [#allocation4], 0
    %s14 = scalar_lea.sflag [#allocation4], 1
    %15 = vsyncpa %s14, 0
    loop: start=0, step=1, limit=4
    $region2: #{tpu_custom_call.1} parent=1 // loop_pre_header
      _
    $region3: #{tpu_custom_call.1} parent=1 // loop_header
      %s17 = sphi 0, %s21
      %p18 = scmp.ge.s32.totalorder %s17, 4
      %s27 = sphi 0, %s29
      %s30 = sphi 0, %s27
      %s31 = sphi 0, %s30
      %s47 = sphi 0, %s31
      %s51 = sphi 0, %s51
      %s53 = sphi 0, %s51
      %s54 = sphi 0, %s53
      %s68 = sphi 0, %s54
      %s72 = sphi 0, %s72
      %s74 = sphi 0, %s72
      %s75 = sphi 0, %s74
      %s89 = sphi 0, %s75
      %s93 = sphi 0, %s93
      %s95 = sphi 0, %s93
      %s96 = sphi 0, %s95
      %s110 = sphi 0, %s96
      %s114 = sphi 0, %s114
      %s116 = sphi 0, %s114
      %s117 = sphi 0, %s116
      %s131 = sphi 0, %s117
      %s137 = sphi 0, %s139
      %s140 = sphi 0, %s137
      %s141 = sphi 0, %s140
      %s157 = sphi 0, %s141
    $region4: #{tpu_custom_call.1} parent=1 // loop_header_branch
      %20 = sbr.rel (%p18) target = $region8
    $region5: #{tpu_custom_call.1} parent=1 // loop_body
      %s22 = ssub.s32 %s17, 1
      %s23 = ssub.s32 %s17, 2
      %s24 = sadd.s32 %s17, 1
      %s25 = ssub.s32 %s17, %s24
      %p26 = scmp.eq.s32.totalorder %s25, 0
      %s28 = sadd.s32 %s27, 1
      %s29 = scalar_select %p26, %s27, %s28
      %p32 = pneg %p26
      %p33 = scmp.eq.s32.totalorder %s17, 1
      %p34 = por %p32, %p33
      %p35 = scmp.ne.s32.totalorder %s27, %s30
      %p36 = scmp.eq.s32.totalorder %s17, 0
      %p37 = por %p35, %p36
      %p38 = scmp.ne.s32.totalorder %s27, %s30
      %p39 = scmp.eq.s32.totalorder %s22, 1
      %p40 = por %p38, %p39
      %p41 = scmp.ne.s32.totalorder %s30, %s31
      %p42 = scmp.eq.s32.totalorder %s22, 0
      %p43 = por %p41, %p42
      %p44 = scmp.ne.s32.totalorder %s30, %s31
      %p45 = scmp.eq.s32.totalorder %s23, 1
      %p46 = por %p44, %p45
      %p48 = scmp.ne.s32.totalorder %s31, %s47
      %p49 = scmp.eq.s32.totalorder %s23, 0
      %p50 = por %p48, %p49
      %s52 = sadd.s32 %s51, 1
      %p55 = scmp.eq.s32.totalorder %s17, 1
      %p56 = scmp.ne.s32.totalorder %s51, %s53
      %p57 = scmp.eq.s32.totalorder %s17, 0
      %p58 = por %p56, %p57
      %p59 = scmp.ne.s32.totalorder %s51, %s53
      %p60 = scmp.eq.s32.totalorder %s22, 1
      %p61 = por %p59, %p60
      %p62 = scmp.ne.s32.totalorder %s53, %s54
      %p63 = scmp.eq.s32.totalorder %s22, 0
      %p64 = por %p62, %p63
      %p65 = scmp.ne.s32.totalorder %s53, %s54
      %p66 = scmp.eq.s32.totalorder %s23, 1
      %p67 = por %p65, %p66
      %p69 = scmp.ne.s32.totalorder %s54, %s68
      %p70 = scmp.eq.s32.totalorder %s23, 0
      %p71 = por %p69, %p70
      %s73 = sadd.s32 %s72, 1
      %p76 = scmp.eq.s32.totalorder %s17, 1
      %p77 = scmp.ne.s32.totalorder %s72, %s74
      %p78 = scmp.eq.s32.totalorder %s17, 0
      %p79 = por %p77, %p78
      %p80 = scmp.ne.s32.totalorder %s72, %s74
      %p81 = scmp.eq.s32.totalorder %s22, 1
      %p82 = por %p80, %p81
      %p83 = scmp.ne.s32.totalorder %s74, %s75
      %p84 = scmp.eq.s32.totalorder %s22, 0
      %p85 = por %p83, %p84
      %p86 = scmp.ne.s32.totalorder %s74, %s75
      %p87 = scmp.eq.s32.totalorder %s23, 1
      %p88 = por %p86, %p87
      %p90 = scmp.ne.s32.totalorder %s75, %s89
      %p91 = scmp.eq.s32.totalorder %s23, 0
      %p92 = por %p90, %p91
      %s94 = sadd.s32 %s93, 1
      %p97 = scmp.eq.s32.totalorder %s17, 1
      %p98 = scmp.ne.s32.totalorder %s93, %s95
      %p99 = scmp.eq.s32.totalorder %s17, 0
      %p100 = por %p98, %p99
      %p101 = scmp.ne.s32.totalorder %s93, %s95
      %p102 = scmp.eq.s32.totalorder %s22, 1
      %p103 = por %p101, %p102
      %p104 = scmp.ne.s32.totalorder %s95, %s96
      %p105 = scmp.eq.s32.totalorder %s22, 0
      %p106 = por %p104, %p105
      %p107 = scmp.ne.s32.totalorder %s95, %s96
      %p108 = scmp.eq.s32.totalorder %s23, 1
      %p109 = por %p107, %p108
      %p111 = scmp.ne.s32.totalorder %s96, %s110
      %p112 = scmp.eq.s32.totalorder %s23, 0
      %p113 = por %p111, %p112
      %s115 = sadd.s32 %s114, 1
      %p118 = scmp.eq.s32.totalorder %s17, 1
      %p119 = scmp.ne.s32.totalorder %s114, %s116
      %p120 = scmp.eq.s32.totalorder %s17, 0
      %p121 = por %p119, %p120
      %p122 = scmp.ne.s32.totalorder %s114, %s116
      %p123 = scmp.eq.s32.totalorder %s22, 1
      %p124 = por %p122, %p123
      %p125 = scmp.ne.s32.totalorder %s116, %s117
      %p126 = scmp.eq.s32.totalorder %s22, 0
      %p127 = por %p125, %p126
      %p128 = scmp.ne.s32.totalorder %s116, %s117
      %p129 = scmp.eq.s32.totalorder %s23, 1
      %p130 = por %p128, %p129
      %p132 = scmp.ne.s32.totalorder %s117, %s131
      %p133 = scmp.eq.s32.totalorder %s23, 0
      %p134 = por %p132, %p133
      %s135 = ssub.s32 %s17, %s24
      %p136 = scmp.eq.s32.totalorder %s135, 0
      %s138 = sadd.s32 %s137, 1
      %s139 = scalar_select %p136, %s137, %s138
      %p142 = pneg %p136
      %p143 = scmp.eq.s32.totalorder %s17, 1
      %p144 = por %p142, %p143
      %p145 = scmp.ne.s32.totalorder %s137, %s140
      %p146 = scmp.eq.s32.totalorder %s17, 0
      %p147 = por %p145, %p146
      %p148 = scmp.ne.s32.totalorder %s137, %s140
      %p149 = scmp.eq.s32.totalorder %s22, 1
      %p150 = por %p148, %p149
      %p151 = scmp.ne.s32.totalorder %s140, %s141
      %p152 = scmp.eq.s32.totalorder %s22, 0
      %p153 = por %p151, %p152
      %p154 = scmp.ne.s32.totalorder %s140, %s141
      %p155 = scmp.eq.s32.totalorder %s23, 1
      %p156 = por %p154, %p155
      %p158 = scmp.ne.s32.totalorder %s141, %s157
      %p159 = scmp.eq.s32.totalorder %s23, 0
      %p160 = por %p158, %p159
      %p161 = scmp.le.s32.totalorder 1, %s17
      %p162 = scmp.lt.s32.totalorder %s17, 3
      %p163 = pnand %p161, %p162
      %p164 = pneg %p163
      // Predicated region
      $region9: #{tpu_custom_call.1} parent=5 // pred_check
        _
      $region10: #{tpu_custom_call.1} parent=5 // pred_check_branch
        %166 = sbr.rel (%p163) target = $region12
      $region11: #{tpu_custom_call.1} parent=5 // pred_region
        %s167 = ssub.s32 %s17, 1
        // Predicated region
        $region13: #{tpu_custom_call.1} parent=11 // pred_check
          %p168 = pneg %p64
        $region14: #{tpu_custom_call.1} parent=11 // pred_check_branch
          %170 = sbr.rel (%p168) target = $region16
        $region15: #{tpu_custom_call.1} parent=11 // pred_region
          _
        $region16: #{tpu_custom_call.1} parent=11 // pred_fallthru
          _
        // Predicated region
        $region17: #{tpu_custom_call.1} parent=11 // pred_check
          %p171 = pneg %p85
        $region18: #{tpu_custom_call.1} parent=11 // pred_check_branch
          %173 = sbr.rel (%p171) target = $region20
        $region19: #{tpu_custom_call.1} parent=11 // pred_region
          _
        $region20: #{tpu_custom_call.1} parent=11 // pred_fallthru
          _
        // Predicated region
        $region21: #{tpu_custom_call.1} parent=11 // pred_check
          %p174 = pneg %p106
        $region22: #{tpu_custom_call.1} parent=11 // pred_check_branch
          %176 = sbr.rel (%p174) target = $region24
        $region23: #{tpu_custom_call.1} parent=11 // pred_region
          _
        $region24: #{tpu_custom_call.1} parent=11 // pred_fallthru
          _
        // Predicated region
        $region25: #{tpu_custom_call.1} parent=11 // pred_check
          %p177 = pneg %p127
        $region26: #{tpu_custom_call.1} parent=11 // pred_check_branch
          %179 = sbr.rel (%p177) target = $region28
        $region27: #{tpu_custom_call.1} parent=11 // pred_region
          _
        $region28: #{tpu_custom_call.1} parent=11 // pred_fallthru
          _
      $region12: #{tpu_custom_call.1} parent=5 // pred_fallthru
        _
      %p180 = scmp.lt.s32.totalorder %s17, 2
      // Predicated region
      $region29: #{tpu_custom_call.1} parent=5 // pred_check
        %p181 = pneg %p180
      $region30: #{tpu_custom_call.1} parent=5 // pred_check_branch
        %183 = sbr.rel (%p181) target = $region32
      $region31: #{tpu_custom_call.1} parent=5 // pred_region
        // Predicated region
        $region33: #{tpu_custom_call.1} parent=31 // pred_check
          %p184 = pneg %p37
        $region34: #{tpu_custom_call.1} parent=31 // pred_check_branch
          %186 = sbr.rel (%p184) target = $region36
        $region35: #{tpu_custom_call.1} parent=31 // pred_region
          %s187 = sand.u32 %s27, 1
          %s188 = scalar_lea.sflag [#allocation3], %s187
          %s189 = sand.u32 %s27, 1
          %s190 = smul.addr %s189, 64
          %s191 = scalar_lea.vmem [#allocation2], %s190
          %s193 = ssub.s32 1024, 1024
          %194 = vsyncadd %s188, %s193
          %s195 = smul.addr %s17, 8
          %s196 = smul.addr %s195, 128
          %s197 = scalar_lea.hbm %s0, %s196
          %s198 = sshll.u32 %s191, 4
          %s199 = int_to_ptr.vmem [resolvable:$true] %s198
          %204 = dma.hbm_to_vmem [thread:$0]  %s197, 1024, %s199, %s188, 256, 256, 16
        $region36: #{tpu_custom_call.1} parent=31 // pred_fallthru
          _
      $region32: #{tpu_custom_call.1} parent=5 // pred_fallthru
        _
      %p205 = scmp.le.s32.totalorder 1, %s17
      %p206 = scmp.lt.s32.totalorder %s17, 3
      %p207 = pnand %p205, %p206
      %p208 = pneg %p207
      // Predicated region
      $region37: #{tpu_custom_call.1} parent=5 // pred_check
        _
      $region38: #{tpu_custom_call.1} parent=5 // pred_check_branch
        %210 = sbr.rel (%p207) target = $region40
      $region39: #{tpu_custom_call.1} parent=5 // pred_region
        %s211 = ssub.s32 %s17, 1
        %s212 = sand.u32 %s30, 1
        %s213 = scalar_lea.sflag [#allocation3], %s212
        %s214 = sand.u32 %s30, 1
        %s215 = smul.addr %s214, 64
        %s216 = scalar_lea.vmem [#allocation2], %s215
        // Predicated region
        $region41: #{tpu_custom_call.1} parent=39 // pred_check
          %p217 = pneg %p43
        $region42: #{tpu_custom_call.1} parent=39 // pred_check_branch
          %219 = sbr.rel (%p217) target = $region44
        $region43: #{tpu_custom_call.1} parent=39 // pred_region
          %220 = dma.done %s213, 1024
        $region44: #{tpu_custom_call.1} parent=39 // pred_fallthru
          _
        %s221 = sand.u32 %s30, 1
        %s222 = scalar_lea.sflag [#allocation3], %s221
        %s223 = sand.u32 %s30, 1
        %s224 = smul.addr %s223, 64
        %s225 = scalar_lea.vmem [#allocation2], %s224
        %p226 = pneg %p43
        %p227 = pneg %p40
        %p228 = pneg %p64
        %p229 = pneg %p61
        %p230 = pneg %p85
        %p231 = pneg %p82
        %p232 = pneg %p106
        %p233 = pneg %p103
        %p234 = pneg %p127
        %p235 = pneg %p124
        %p236 = pneg %p153
        %p237 = pneg %p150
        %s238 = sand.u32 %s140, 1
        %s239 = scalar_lea.sflag [#allocation4], %s238
        %s240 = sand.u32 %s140, 1
        %s241 = smul.addr %s240, 64
        %s242 = scalar_lea.vmem [#allocation5], %s241
        %v243 = vld [vmem:[%s216] sm:$0xff]
        %v244 = vld [vmem:[%s216 + $0x8] sm:$0xff]
        %v245 = vld [vmem:[%s216 + $0x10] sm:$0xff]
        %v246 = vld [vmem:[%s216 + $0x18] sm:$0xff]
        %v247 = vld [vmem:[%s216 + $0x20] sm:$0xff]
        %v248 = vld [vmem:[%s216 + $0x28] sm:$0xff]
        %v249 = vld [vmem:[%s216 + $0x30] sm:$0xff]
        %v250 = vld [vmem:[%s216 + $0x38] sm:$0xff]
        %v251 = vadd.f32 %v243, %v244
        %252 = vadd.xlane.f32.xlu0 %v251
        %v253 = vpop.xlane.xlu0 %252
        %v254 = vadd.f32 %v245, %v246
        %255 = vadd.xlane.f32.xlu0 %v254
        %v256 = vpop.xlane.xlu0 %255
        %v257 = vadd.f32 %v247, %v248
        %258 = vadd.xlane.f32.xlu0 %v257
        %v259 = vpop.xlane.xlu0 %258
        %v260 = vadd.f32 %v249, %v250
        %261 = vadd.xlane.f32.xlu0 %v260
        %v262 = vpop.xlane.xlu0 %261
        %v263 = vrcp.pop 256.0
        %v264 = vmul.f32 %v253, %v263
        %v265 = vmul.f32 %v256, %v263
        %v266 = vmul.f32 %v259, %v263
        %v267 = vmul.f32 %v262, %v263
        %v268 = vmax.f32 %v243, %v244
        %269 = vmax.xlane.f32.xlu0 %v268
        %v270 = vpop.xlane.xlu0 %269
        %v271 = vmax.f32 %v245, %v246
        %272 = vmax.xlane.f32.xlu0 %v271
        %v273 = vpop.xlane.xlu0 %272
        %v274 = vmax.f32 %v247, %v248
        %275 = vmax.xlane.f32.xlu0 %v274
        %v276 = vpop.xlane.xlu0 %275
        %v277 = vmax.f32 %v249, %v250
        %278 = vmax.xlane.f32.xlu0 %v277
        %v279 = vpop.xlane.xlu0 %278
        %vm280 = vcmask 7168
        %v281 = vsel %vm280, %v264, %v270
        %v282 = vsel %vm280, %v265, %v273
        %v283 = vsel %vm280, %v266, %v276
        %v284 = vsel %vm280, %v267, %v279
        %v285 = vld [vmem:[%s1] sm:$0x3]
        %vm286 = vcmask 261120
        %v288 = vsel %vm286, %v285, 0
        %290 = vmatprep.subr.mxu0 0.0
        %291 = vmatpush1.msra.mxu0 %v281
        %292 = vmatprep.subr.mxu0 0.0
        %293 = vmatpush1.msra.mxu0 %v282
        %294 = vmatprep.subr.mxu0 0.0
        %295 = vmatpush1.msra.mxu0 %v283
        %296 = vmatprep.subr.mxu0 0.0
        %297 = vmatpush1.msra.mxu0 %v284
        %298 = vmatprep.subr.mxu0 0.0
        %299 = vmatpush1.msra.mxu0 0.0
        %300 = vmatprep.subr.mxu0 0.0
        %301 = vmatpush1.msra.mxu0 0.0
        %302 = vmatprep.subr.mxu0 0.0
        %303 = vmatpush1.msra.mxu0 0.0
        %304 = vmatprep.subr.mxu0 0.0
        %305 = vmatpush1.msra.mxu0 0.0
        %306 = vmatprep.subr.mxu0 0.0
        %307 = vmatpush1.msra.mxu0 0.0
        %308 = vmatprep.subr.mxu0 0.0
        %309 = vmatpush1.msra.mxu0 0.0
        %310 = vmatprep.subr.mxu0 0.0
        %311 = vmatpush1.msra.mxu0 0.0
        %312 = vmatprep.subr.mxu0 0.0
        %313 = vmatpush1.msra.mxu0 0.0
        %314 = vmatprep.subr.mxu0 0.0
        %315 = vmatpush1.msra.mxu0 0.0
        %316 = vmatprep.subr.mxu0 0.0
        %317 = vmatpush1.msra.mxu0 0.0
        %318 = vmatprep.subr.mxu0 0.0
        %319 = vmatpush1.msra.mxu0 0.0
        %320 = vmatprep.subr.mxu0 0.0
        %321 = vmatpush1.msra.mxu0 0.0
        %322 = vmatprep.subr.mxu0 0.0
        %323 = vmatpush1.msra.mxu0 0.0
        %324 = vmatprep.subr.mxu0 0.0
        %325 = vmatpush1.msra.mxu0 0.0
        %326 = vmatprep.subr.mxu0 0.0
        %327 = vmatpush1.msra.mxu0 0.0
        %328 = vmatprep.subr.mxu0 0.0
        %329 = vmatpush1.msra.mxu0 0.0
        %330 = vmatprep.subr.mxu0 0.0
        %331 = vmatpush1.msra.mxu0 0.0
        %332 = vmatprep.subr.mxu0 0.0
        %333 = vmatpush1.msra.mxu0 0.0
        %334 = vmatprep.subr.mxu0 0.0
        %335 = vmatpush1.msra.mxu0 0.0
        %336 = vmatprep.subr.mxu0 0.0
        %337 = vmatpush1.msra.mxu0 0.0
        %338 = vmatprep.subr.mxu0 0.0
        %339 = vmatpush1.msra.mxu0 0.0
        %340 = vmatprep.subr.mxu0 0.0
        %341 = vmatpush1.msra.mxu0 0.0
        %342 = vmatprep.subr.mxu0 0.0
        %343 = vmatpush1.msra.mxu0 0.0
        %344 = vmatprep.subr.mxu0 0.0
        %345 = vmatpush1.msra.mxu0 0.0
        %346 = vmatprep.subr.mxu0 0.0
        %347 = vmatpush1.msra.mxu0 0.0
        %348 = vmatprep.subr.mxu0 0.0
        %349 = vmatpush1.msra.mxu0 0.0
        %350 = vmatprep.subr.mxu0 0.0
        %351 = vmatpush1.msra.mxu0 0.0
        %352 = vmatprep.subr.mxu0 0.0
        %353 = vmatpush1.msra.mxu0 0.0
        %354 = vmatprep.mubr.f32.mxu0 0.0
        %355 = vmatmul.mubr.f32.gmra.mrb[0].mxu0 %v288
        %v356 = vpop.f32.mrb[0].mxu0
        %v357 = vadd.f32 0.0, %v356
        %v358 = vpop.f32.mrb[0].mxu0
        %359 = vdwg.mxu0
        %v360 = vmax.f32 %v357, 0.0
        %v361 = vld [vmem:[%s2] sm:$0xff]
        %v362 = vld [vmem:[%s2 + $0x8] sm:$0xff]
        %v363 = vld [vmem:[%s2 + $0x10] sm:$0xff]
        %v364 = vld [vmem:[%s2 + $0x18] sm:$0xff]
        %vm365 = vcmask 15360
        %v367 = vsel %vm365, %v361, 0
        %v370 = vsel %vm365, %v362, 0
        %v373 = vsel %vm365, %v363, 0
        %v376 = vsel %vm365, %v364, 0
        %vm378 = vcmask 1041408
        %v380 = vsel %vm378, %v360, 0
        %382 = vmatprep.subr.mxu0 0.0
        %383 = vmatpush1.msra.mxu0 %v380
        %384 = vmatprep.subr.mxu0 0.0
        %385 = vmatpush1.msra.mxu0 0.0
        %386 = vmatprep.subr.mxu0 0.0
        %387 = vmatpush1.msra.mxu0 0.0
        %388 = vmatprep.subr.mxu0 0.0
        %389 = vmatpush1.msra.mxu0 0.0
        %390 = vmatprep.subr.mxu0 0.0
        %391 = vmatpush1.msra.mxu0 0.0
        %392 = vmatprep.subr.mxu0 0.0
        %393 = vmatpush1.msra.mxu0 0.0
        %394 = vmatprep.subr.mxu0 0.0
        %395 = vmatpush1.msra.mxu0 0.0
        %396 = vmatprep.subr.mxu0 0.0
        %397 = vmatpush1.msra.mxu0 0.0
        %398 = vmatprep.subr.mxu0 0.0
        %399 = vmatpush1.msra.mxu0 0.0
        %400 = vmatprep.subr.mxu0 0.0
        %401 = vmatpush1.msra.mxu0 0.0
        %402 = vmatprep.subr.mxu0 0.0
        %403 = vmatpush1.msra.mxu0 0.0
        %404 = vmatprep.subr.mxu0 0.0
        %405 = vmatpush1.msra.mxu0 0.0
        %406 = vmatprep.subr.mxu0 0.0
        %407 = vmatpush1.msra.mxu0 0.0
        %408 = vmatprep.subr.mxu0 0.0
        %409 = vmatpush1.msra.mxu0 0.0
        %410 = vmatprep.subr.mxu0 0.0
        %411 = vmatpush1.msra.mxu0 0.0
        %412 = vmatprep.subr.mxu0 0.0
        %413 = vmatpush1.msra.mxu0 0.0
        %414 = vmatprep.subr.mxu0 0.0
        %415 = vmatpush1.msra.mxu0 0.0
        %416 = vmatprep.subr.mxu0 0.0
        %417 = vmatpush1.msra.mxu0 0.0
        %418 = vmatprep.subr.mxu0 0.0
        %419 = vmatpush1.msra.mxu0 0.0
        %420 = vmatprep.subr.mxu0 0.0
        %421 = vmatpush1.msra.mxu0 0.0
        %422 = vmatprep.subr.mxu0 0.0
        %423 = vmatpush1.msra.mxu0 0.0
        %424 = vmatprep.subr.mxu0 0.0
        %425 = vmatpush1.msra.mxu0 0.0
        %426 = vmatprep.subr.mxu0 0.0
        %427 = vmatpush1.msra.mxu0 0.0
        %428 = vmatprep.subr.mxu0 0.0
        %429 = vmatpush1.msra.mxu0 0.0
        %430 = vmatprep.subr.mxu0 0.0
        %431 = vmatpush1.msra.mxu0 0.0
        %432 = vmatprep.subr.mxu0 0.0
        %433 = vmatpush1.msra.mxu0 0.0
        %434 = vmatprep.subr.mxu0 0.0
        %435 = vmatpush1.msra.mxu0 0.0
        %436 = vmatprep.subr.mxu0 0.0
        %437 = vmatpush1.msra.mxu0 0.0
        %438 = vmatprep.subr.mxu0 0.0
        %439 = vmatpush1.msra.mxu0 0.0
        %440 = vmatprep.subr.mxu0 0.0
        %441 = vmatpush1.msra.mxu0 0.0
        %442 = vmatprep.subr.mxu0 0.0
        %443 = vmatpush1.msra.mxu0 0.0
        %444 = vmatprep.subr.mxu0 0.0
        %445 = vmatpush1.msra.mxu0 0.0
        %446 = vmatprep.mubr.f32.mxu0 0.0
        %447 = vmatmul.mubr.f32.gmra.mrb[0].mxu0 %v367
        %v448 = vpop.f32.mrb[0].mxu0
        %v449 = vadd.f32 0.0, %v448
        %v450 = vpop.f32.mrb[0].mxu0
        %451 = vmatprep.mubr.f32.mxu0 0.0
        %452 = vmatmul.mubr.f32.gmra.mrb[0].mxu0 %v370
        %v453 = vpop.f32.mrb[0].mxu0
        %v454 = vadd.f32 0.0, %v453
        %v455 = vpop.f32.mrb[0].mxu0
        %456 = vmatprep.mubr.f32.mxu0 0.0
        %457 = vmatmul.mubr.f32.gmra.mrb[0].mxu0 %v373
        %v458 = vpop.f32.mrb[0].mxu0
        %v459 = vadd.f32 0.0, %v458
        %v460 = vpop.f32.mrb[0].mxu0
        %461 = vmatprep.mubr.f32.mxu0 0.0
        %462 = vmatmul.mubr.f32.gmra.mrb[0].mxu0 %v376
        %v463 = vpop.f32.mrb[0].mxu0
        %v464 = vadd.f32 0.0, %v463
        %v465 = vpop.f32.mrb[0].mxu0
        %466 = vdwg.mxu0
        %471 = vrot.lane.b32.xlu0 %v449, 127
        %v472 = vpop.permute.xlu0 %471
        %473 = vrot.lane.b32.xlu0 %v454, 127
        %v474 = vpop.permute.xlu0 %473
        %475 = vrot.lane.b32.xlu0 %v459, 127
        %v476 = vpop.permute.xlu0 %475
        %477 = vrot.lane.b32.xlu0 %v464, 127
        %v478 = vpop.permute.xlu0 %477
        %v483 = vadd.f32 %v449, %v472
        %v484 = vadd.f32 %v454, %v474
        %v485 = vadd.f32 %v459, %v476
        %v486 = vadd.f32 %v464, %v478
        %v487 = vxor.u32 %v483, 2147483648
        %v488 = vxor.u32 %v484, 2147483648
        %v489 = vxor.u32 %v485, 2147483648
        %v490 = vxor.u32 %v486, 2147483648
        %v491 = vmul.f32 %v487, 1.442695
        %v492 = vpow.pop %v491
        %v493 = vmul.f32 %v488, 1.442695
        %v494 = vpow.pop %v493
        %v495 = vmul.f32 %v489, 1.442695
        %v496 = vpow.pop %v495
        %v497 = vmul.f32 %v490, 1.442695
        %v498 = vpow.pop %v497
        %v499 = vadd.f32 %v492, 1.0
        %v500 = vadd.f32 %v494, 1.0
        %v501 = vadd.f32 %v496, 1.0
        %v502 = vadd.f32 %v498, 1.0
        %v503 = vrcp.pop %v499
        %v504 = vmul.f32 1.0, %v503
        %v505 = vrcp.pop %v500
        %v506 = vmul.f32 1.0, %v505
        %v507 = vrcp.pop %v501
        %v508 = vmul.f32 1.0, %v507
        %v509 = vrcp.pop %v502
        %v510 = vmul.f32 1.0, %v509
        %512 = vset.pattern.permute.xlu0 0
        %513 = vperm.xlu0 %512, %v504
        %v514 = vpop.permute.xlu0 %513
        %517 = vset.pattern.permute.xlu0 0
        %518 = vperm.xlu0 %517, %v506
        %v519 = vpop.permute.xlu0 %518
        %522 = vset.pattern.permute.xlu0 0
        %523 = vperm.xlu0 %522, %v508
        %v524 = vpop.permute.xlu0 %523
        %527 = vset.pattern.permute.xlu0 0
        %528 = vperm.xlu0 %527, %v510
        %v529 = vpop.permute.xlu0 %528
        %v531 = vmul.f32 %v243, %v514
        %v532 = vmul.f32 %v244, %v514
        %v533 = vmul.f32 %v245, %v519
        %v534 = vmul.f32 %v246, %v519
        %v535 = vmul.f32 %v247, %v524
        %v536 = vmul.f32 %v248, %v524
        %v537 = vmul.f32 %v249, %v529
        %v538 = vmul.f32 %v250, %v529
        %v539 = vadd.f32 %v531, %v533
        %v540 = vadd.f32 %v539, %v535
        %v541 = vadd.f32 %v540, %v537
        %v542 = vrot.slane %v541, 4
        %v543 = vadd.f32 %v541, %v542
        %v544 = vrot.slane %v543, 2
        %v545 = vadd.f32 %v543, %v544
        %v546 = vrot.slane %v545, 1
        %v547 = vadd.f32 %v545, %v546
        %v548 = vadd.f32 %v532, %v534
        %v549 = vadd.f32 %v548, %v536
        %v550 = vadd.f32 %v549, %v538
        %v551 = vrot.slane %v550, 4
        %v552 = vadd.f32 %v550, %v551
        %v553 = vrot.slane %v552, 2
        %v554 = vadd.f32 %v552, %v553
        %v555 = vrot.slane %v554, 1
        %v556 = vadd.f32 %v554, %v555
        %v557 = vrcp.pop 32.0
        %v558 = vmul.f32 %v547, %v557
        %v559 = vmul.f32 %v556, %v557
        %v560 = vmax.f32 %v531, %v535
        %v561 = vmax.f32 %v533, %v537
        %v562 = vmax.f32 %v560, %v561
        %v563 = vrot.slane %v562, 4
        %v564 = vmax.f32 %v562, %v563
        %v565 = vrot.slane %v564, 2
        %v566 = vmax.f32 %v564, %v565
        %v567 = vrot.slane %v566, 1
        %v568 = vmax.f32 %v566, %v567
        %v569 = vmax.f32 %v532, %v536
        %v570 = vmax.f32 %v534, %v538
        %v571 = vmax.f32 %v569, %v570
        %v572 = vrot.slane %v571, 4
        %v573 = vmax.f32 %v571, %v572
        %v574 = vrot.slane %v573, 2
        %v575 = vmax.f32 %v573, %v574
        %v576 = vrot.slane %v575, 1
        %v577 = vmax.f32 %v575, %v576
        %vm578 = vcmask 1040384
        %v579 = vsel %vm578, %v558, %v568
        %v580 = vsel %vm578, %v559, %v577
        %583 = vrot.lane.b32.xlu0 %v579, 48
        %v584 = vpop.permute.xlu0 %583
        %585 = vrot.lane.b32.xlu0 %v580, 48
        %v586 = vpop.permute.xlu0 %585
        %vm587 = vcmask 392192
        %v588 = vsel %vm587, %v584, %v586
        %v592 = vsel %vm587, 0.0, %v584
        %v593 = vsel %vm587, %v586, 0.0
        %596 = vrot.lane.b32.xlu0 %v592, 112
        %v597 = vpop.permute.xlu0 %596
        %598 = vrot.lane.b32.xlu0 %v588, 112
        %v599 = vpop.permute.xlu0 %598
        %600 = vrot.lane.b32.xlu0 %v593, 112
        %v601 = vpop.permute.xlu0 %600
        %vm602 = vcmask 916480
        %v603 = vsel %vm602, %v597, %v599
        %v604 = vsel %vm602, %v599, %v601
        %v609 = vsel %vm602, %v601, %v597
        %610 = vrot.lane.b32.xlu0 %v592, 96
        %v611 = vpop.permute.xlu0 %610
        %612 = vrot.lane.b32.xlu0 %v588, 96
        %v613 = vpop.permute.xlu0 %612
        %614 = vrot.lane.b32.xlu0 %v593, 96
        %v615 = vpop.permute.xlu0 %614
        %vm616 = vcmask 785408
        %v617 = vsel %vm616, %v611, %v613
        %v618 = vsel %vm616, %v613, %v615
        %v623 = vsel %vm616, %v615, %v611
        %624 = vrot.lane.b32.xlu0 %v592, 80
        %v625 = vpop.permute.xlu0 %624
        %626 = vrot.lane.b32.xlu0 %v588, 80
        %v627 = vpop.permute.xlu0 %626
        %628 = vrot.lane.b32.xlu0 %v593, 80
        %v629 = vpop.permute.xlu0 %628
        %vm630 = vcmask 654336
        %v631 = vsel %vm630, %v625, %v627
        %v632 = vsel %vm630, %v627, %v629
        %v637 = vsel %vm630, %v629, %v625
        %638 = vrot.lane.b32.xlu0 %v592, 64
        %v639 = vpop.permute.xlu0 %638
        %640 = vrot.lane.b32.xlu0 %v588, 64
        %v641 = vpop.permute.xlu0 %640
        %642 = vrot.lane.b32.xlu0 %v593, 64
        %v643 = vpop.permute.xlu0 %642
        %vm644 = vcmask 523264
        %v645 = vsel %vm644, %v639, %v641
        %v646 = vsel %vm644, %v641, %v643
        %v651 = vsel %vm644, %v643, %v639
        %652 = vrot.lane.b32.xlu0 %v592, 48
        %v653 = vpop.permute.xlu0 %652
        %654 = vrot.lane.b32.xlu0 %v588, 48
        %v655 = vpop.permute.xlu0 %654
        %656 = vrot.lane.b32.xlu0 %v593, 48
        %v657 = vpop.permute.xlu0 %656
        %v658 = vsel %vm587, %v653, %v655
        %v659 = vsel %vm587, %v655, %v657
        %v664 = vsel %vm587, %v657, %v653
        %665 = vrot.lane.b32.xlu0 %v592, 32
        %v666 = vpop.permute.xlu0 %665
        %667 = vrot.lane.b32.xlu0 %v588, 32
        %v668 = vpop.permute.xlu0 %667
        %669 = vrot.lane.b32.xlu0 %v593, 32
        %v670 = vpop.permute.xlu0 %669
        %v671 = vsel %vm286, %v666, %v668
        %v672 = vsel %vm286, %v668, %v670
        %v677 = vsel %vm286, %v670, %v666
        %v678 = vld [vmem:[%s3] sm:$0x3]
        %v679 = vld [vmem:[%s4] sm:$0x7f]
        %v680 = vld [vmem:[%s4 + $0x8] sm:$0x7f]
        %682 = vset.pattern.permute.xlu0 0
        %683 = vperm.xlu0 %682, %v678
        %v684 = vpop.permute.xlu0 %683
        %v686 = vmul.f32 %v684, %v592
        %v687 = vmul.f32 %v684, %v588
        %v688 = vmul.f32 %v684, %v593
        %689 = vset.pattern.permute.xlu0 7
        %690 = vperm.xlu0 %689, %v678
        %v691 = vpop.permute.xlu0 %690
        %v693 = vmul.f32 %v691, %v603
        %v694 = vmul.f32 %v691, %v604
        %v695 = vmul.f32 %v691, %v609
        %v696 = vadd.f32 %v686, %v693
        %v697 = vadd.f32 %v687, %v694
        %v698 = vadd.f32 %v688, %v695
        %699 = vset.pattern.permute.xlu0 14
        %700 = vperm.xlu0 %699, %v678
        %v701 = vpop.permute.xlu0 %700
        %v703 = vmul.f32 %v701, %v617
        %v704 = vmul.f32 %v701, %v618
        %v705 = vmul.f32 %v701, %v623
        %v706 = vadd.f32 %v696, %v703
        %v707 = vadd.f32 %v697, %v704
        %v708 = vadd.f32 %v698, %v705
        %709 = vset.pattern.permute.xlu0 21
        %710 = vperm.xlu0 %709, %v678
        %v711 = vpop.permute.xlu0 %710
        %v713 = vmul.f32 %v711, %v631
        %v714 = vmul.f32 %v711, %v632
        %v715 = vmul.f32 %v711, %v637
        %v716 = vadd.f32 %v706, %v713
        %v717 = vadd.f32 %v707, %v714
        %v718 = vadd.f32 %v708, %v715
        %719 = vset.pattern.permute.xlu0 28
        %720 = vperm.xlu0 %719, %v678
        %v721 = vpop.permute.xlu0 %720
        %v723 = vmul.f32 %v721, %v645
        %v724 = vmul.f32 %v721, %v646
        %v725 = vmul.f32 %v721, %v651
        %v726 = vadd.f32 %v716, %v723
        %v727 = vadd.f32 %v717, %v724
        %v728 = vadd.f32 %v718, %v725
        %729 = vset.pattern.permute.xlu0 35
        %730 = vperm.xlu0 %729, %v678
        %v731 = vpop.permute.xlu0 %730
        %v733 = vmul.f32 %v731, %v658
        %v734 = vmul.f32 %v731, %v659
        %v735 = vmul.f32 %v731, %v664
        %v736 = vadd.f32 %v726, %v733
        %v737 = vadd.f32 %v727, %v734
        %v738 = vadd.f32 %v728, %v735
        %739 = vset.pattern.permute.xlu0 42
        %740 = vperm.xlu0 %739, %v678
        %v741 = vpop.permute.xlu0 %740
        %v743 = vmul.f32 %v741, %v671
        %v744 = vmul.f32 %v741, %v672
        %v745 = vmul.f32 %v741, %v677
        %v746 = vadd.f32 %v736, %v743
        %v747 = vadd.f32 %v737, %v744
        %v748 = vadd.f32 %v738, %v745
        %750 = vrot.lane.b32.xlu0 %v748, 3
        %v751 = vpop.permute.xlu0 %750
        %755 = vrot.lane.b32.xlu0 %v746, 3
        %v756 = vpop.permute.xlu0 %755
        %757 = vrot.lane.b32.xlu0 %v747, 3
        %v758 = vpop.permute.xlu0 %757
        %vm759 = vcmask 23552
        %v760 = vsel %vm759, %v756, %v758
        %v763 = vsel %vm759, %v751, %v756
        %v764 = vlaneseq
        %v765 = vshrl.u32 %v764, 7
        %v766 = vsub.s32 0, %v765
        %v767 = vrot.slane %v679, %v766
        %v768 = vlaneseq
        %v769 = vshrl.u32 %v768, 7
        %v770 = vsub.s32 0, %v769
        %v771 = vrot.slane %v680, %v770
        %v772 = vmul.f32 %v763, %v767
        %v773 = vmul.f32 %v760, %v771
        %774 = vset.pattern.permute.xlu0 1
        %775 = vperm.xlu0 %774, %v678
        %v776 = vpop.permute.xlu0 %775
        %v778 = vmul.f32 %v776, %v592
        %v779 = vmul.f32 %v776, %v588
        %v780 = vmul.f32 %v776, %v593
        %781 = vset.pattern.permute.xlu0 8
        %782 = vperm.xlu0 %781, %v678
        %v783 = vpop.permute.xlu0 %782
        %v785 = vmul.f32 %v783, %v603
        %v786 = vmul.f32 %v783, %v604
        %v787 = vmul.f32 %v783, %v609
        %v788 = vadd.f32 %v778, %v785
        %v789 = vadd.f32 %v779, %v786
        %v790 = vadd.f32 %v780, %v787
        %791 = vset.pattern.permute.xlu0 15
        %792 = vperm.xlu0 %791, %v678
        %v793 = vpop.permute.xlu0 %792
        %v795 = vmul.f32 %v793, %v617
        %v796 = vmul.f32 %v793, %v618
        %v797 = vmul.f32 %v793, %v623
        %v798 = vadd.f32 %v788, %v795
        %v799 = vadd.f32 %v789, %v796
        %v800 = vadd.f32 %v790, %v797
        %801 = vset.pattern.permute.xlu0 22
        %802 = vperm.xlu0 %801, %v678
        %v803 = vpop.permute.xlu0 %802
        %v805 = vmul.f32 %v803, %v631
        %v806 = vmul.f32 %v803, %v632
        %v807 = vmul.f32 %v803, %v637
        %v808 = vadd.f32 %v798, %v805
        %v809 = vadd.f32 %v799, %v806
        %v810 = vadd.f32 %v800, %v807
        %811 = vset.pattern.permute.xlu0 29
        %812 = vperm.xlu0 %811, %v678
        %v813 = vpop.permute.xlu0 %812
        %v815 = vmul.f32 %v813, %v645
        %v816 = vmul.f32 %v813, %v646
        %v817 = vmul.f32 %v813, %v651
        %v818 = vadd.f32 %v808, %v815
        %v819 = vadd.f32 %v809, %v816
        %v820 = vadd.f32 %v810, %v817
        %821 = vset.pattern.permute.xlu0 36
        %822 = vperm.xlu0 %821, %v678
        %v823 = vpop.permute.xlu0 %822
        %v825 = vmul.f32 %v823, %v658
        %v826 = vmul.f32 %v823, %v659
        %v827 = vmul.f32 %v823, %v664
        %v828 = vadd.f32 %v818, %v825
        %v829 = vadd.f32 %v819, %v826
        %v830 = vadd.f32 %v820, %v827
        %831 = vset.pattern.permute.xlu0 43
        %832 = vperm.xlu0 %831, %v678
        %v833 = vpop.permute.xlu0 %832
        %v835 = vmul.f32 %v833, %v671
        %v836 = vmul.f32 %v833, %v672
        %v837 = vmul.f32 %v833, %v677
        %v838 = vadd.f32 %v828, %v835
        %v839 = vadd.f32 %v829, %v836
        %v840 = vadd.f32 %v830, %v837
        %842 = vrot.lane.b32.xlu0 %v840, 2
        %v843 = vpop.permute.xlu0 %842
        %847 = vrot.lane.b32.xlu0 %v838, 2
        %v848 = vpop.permute.xlu0 %847
        %849 = vrot.lane.b32.xlu0 %v839, 2
        %v850 = vpop.permute.xlu0 %849
        %v851 = vsel %vm365, %v848, %v850
        %v854 = vsel %vm365, %v843, %v848
        %v855 = vlaneseq
        %v856 = vshrl.u32 %v855, 7
        %v857 = vsub.s32 1, %v856
        %v858 = vrot.slane %v679, %v857
        %v859 = vlaneseq
        %v860 = vshrl.u32 %v859, 7
        %v861 = vsub.s32 1, %v860
        %v862 = vrot.slane %v680, %v861
        %v863 = vmul.f32 %v854, %v858
        %v864 = vmul.f32 %v851, %v862
        %v865 = vadd.f32 %v772, %v863
        %v866 = vadd.f32 %v773, %v864
        %867 = vset.pattern.permute.xlu0 2
        %868 = vperm.xlu0 %867, %v678
        %v869 = vpop.permute.xlu0 %868
        %v871 = vmul.f32 %v869, %v592
        %v872 = vmul.f32 %v869, %v588
        %v873 = vmul.f32 %v869, %v593
        %874 = vset.pattern.permute.xlu0 9
        %875 = vperm.xlu0 %874, %v678
        %v876 = vpop.permute.xlu0 %875
        %v878 = vmul.f32 %v876, %v603
        %v879 = vmul.f32 %v876, %v604
        %v880 = vmul.f32 %v876, %v609
        %v881 = vadd.f32 %v871, %v878
        %v882 = vadd.f32 %v872, %v879
        %v883 = vadd.f32 %v873, %v880
        %884 = vset.pattern.permute.xlu0 16
        %885 = vperm.xlu0 %884, %v678
        %v886 = vpop.permute.xlu0 %885
        %v888 = vmul.f32 %v886, %v617
        %v889 = vmul.f32 %v886, %v618
        %v890 = vmul.f32 %v886, %v623
        %v891 = vadd.f32 %v881, %v888
        %v892 = vadd.f32 %v882, %v889
        %v893 = vadd.f32 %v883, %v890
        %894 = vset.pattern.permute.xlu0 23
        %895 = vperm.xlu0 %894, %v678
        %v896 = vpop.permute.xlu0 %895
        %v898 = vmul.f32 %v896, %v631
        %v899 = vmul.f32 %v896, %v632
        %v900 = vmul.f32 %v896, %v637
        %v901 = vadd.f32 %v891, %v898
        %v902 = vadd.f32 %v892, %v899
        %v903 = vadd.f32 %v893, %v900
        %904 = vset.pattern.permute.xlu0 30
        %905 = vperm.xlu0 %904, %v678
        %v906 = vpop.permute.xlu0 %905
        %v908 = vmul.f32 %v906, %v645
        %v909 = vmul.f32 %v906, %v646
        %v910 = vmul.f32 %v906, %v651
        %v911 = vadd.f32 %v901, %v908
        %v912 = vadd.f32 %v902, %v909
        %v913 = vadd.f32 %v903, %v910
        %914 = vset.pattern.permute.xlu0 37
        %915 = vperm.xlu0 %914, %v678
        %v916 = vpop.permute.xlu0 %915
        %v918 = vmul.f32 %v916, %v658
        %v919 = vmul.f32 %v916, %v659
        %v920 = vmul.f32 %v916, %v664
        %v921 = vadd.f32 %v911, %v918
        %v922 = vadd.f32 %v912, %v919
        %v923 = vadd.f32 %v913, %v920
        %924 = vset.pattern.permute.xlu0 44
        %925 = vperm.xlu0 %924, %v678
        %v926 = vpop.permute.xlu0 %925
        %v928 = vmul.f32 %v926, %v671
        %v929 = vmul.f32 %v926, %v672
        %v930 = vmul.f32 %v926, %v677
        %v931 = vadd.f32 %v921, %v928
        %v932 = vadd.f32 %v922, %v929
        %v933 = vadd.f32 %v923, %v930
        %935 = vrot.lane.b32.xlu0 %v933, 1
        %v936 = vpop.permute.xlu0 %935
        %940 = vrot.lane.b32.xlu0 %v931, 1
        %v941 = vpop.permute.xlu0 %940
        %942 = vrot.lane.b32.xlu0 %v932, 1
        %v943 = vpop.permute.xlu0 %942
        %v944 = vsel %vm280, %v941, %v943
        %v947 = vsel %vm280, %v936, %v941
        %v948 = vlaneseq
        %v949 = vshrl.u32 %v948, 7
        %v950 = vsub.s32 2, %v949
        %v951 = vrot.slane %v679, %v950
        %v952 = vlaneseq
        %v953 = vshrl.u32 %v952, 7
        %v954 = vsub.s32 2, %v953
        %v955 = vrot.slane %v680, %v954
        %v956 = vmul.f32 %v947, %v951
        %v957 = vmul.f32 %v944, %v955
        %v958 = vadd.f32 %v865, %v956
        %v959 = vadd.f32 %v866, %v957
        %960 = vset.pattern.permute.xlu0 3
        %961 = vperm.xlu0 %960, %v678
        %v962 = vpop.permute.xlu0 %961
        %v964 = vmul.f32 %v962, %v592
        %v965 = vmul.f32 %v962, %v588
        %966 = vset.pattern.permute.xlu0 10
        %967 = vperm.xlu0 %966, %v678
        %v968 = vpop.permute.xlu0 %967
        %v970 = vmul.f32 %v968, %v603
        %v971 = vmul.f32 %v968, %v604
        %v972 = vadd.f32 %v964, %v970
        %v973 = vadd.f32 %v965, %v971
        %974 = vset.pattern.permute.xlu0 17
        %975 = vperm.xlu0 %974, %v678
        %v976 = vpop.permute.xlu0 %975
        %v978 = vmul.f32 %v976, %v617
        %v979 = vmul.f32 %v976, %v618
        %v980 = vadd.f32 %v972, %v978
        %v981 = vadd.f32 %v973, %v979
        %982 = vset.pattern.permute.xlu0 24
        %983 = vperm.xlu0 %982, %v678
        %v984 = vpop.permute.xlu0 %983
        %v986 = vmul.f32 %v984, %v631
        %v987 = vmul.f32 %v984, %v632
        %v988 = vadd.f32 %v980, %v986
        %v989 = vadd.f32 %v981, %v987
        %990 = vset.pattern.permute.xlu0 31
        %991 = vperm.xlu0 %990, %v678
        %v992 = vpop.permute.xlu0 %991
        %v994 = vmul.f32 %v992, %v645
        %v995 = vmul.f32 %v992, %v646
        %v996 = vadd.f32 %v988, %v994
        %v997 = vadd.f32 %v989, %v995
        %998 = vset.pattern.permute.xlu0 38
        %999 = vperm.xlu0 %998, %v678
        %v1000 = vpop.permute.xlu0 %999
        %v1002 = vmul.f32 %v1000, %v658
        %v1003 = vmul.f32 %v1000, %v659
        %v1004 = vadd.f32 %v996, %v1002
        %v1005 = vadd.f32 %v997, %v1003
        %1006 = vset.pattern.permute.xlu0 45
        %1007 = vperm.xlu0 %1006, %v678
        %v1008 = vpop.permute.xlu0 %1007
        %v1010 = vmul.f32 %v1008, %v671
        %v1011 = vmul.f32 %v1008, %v672
        %v1012 = vadd.f32 %v1004, %v1010
        %v1013 = vadd.f32 %v1005, %v1011
        %v1014 = vadd.f32 %v958, %v1012
        %v1015 = vadd.f32 %v959, %v1013
        %1016 = vset.pattern.permute.xlu0 4
        %1017 = vperm.xlu0 %1016, %v678
        %v1018 = vpop.permute.xlu0 %1017
        %v1020 = vmul.f32 %v1018, %v592
        %v1021 = vmul.f32 %v1018, %v588
        %v1022 = vmul.f32 %v1018, %v593
        %1023 = vset.pattern.permute.xlu0 11
        %1024 = vperm.xlu0 %1023, %v678
        %v1025 = vpop.permute.xlu0 %1024
        %v1027 = vmul.f32 %v1025, %v603
        %v1028 = vmul.f32 %v1025, %v604
        %v1029 = vmul.f32 %v1025, %v609
        %v1030 = vadd.f32 %v1020, %v1027
        %v1031 = vadd.f32 %v1021, %v1028
        %v1032 = vadd.f32 %v1022, %v1029
        %1033 = vset.pattern.permute.xlu0 18
        %1034 = vperm.xlu0 %1033, %v678
        %v1035 = vpop.permute.xlu0 %1034
        %v1037 = vmul.f32 %v1035, %v617
        %v1038 = vmul.f32 %v1035, %v618
        %v1039 = vmul.f32 %v1035, %v623
        %v1040 = vadd.f32 %v1030, %v1037
        %v1041 = vadd.f32 %v1031, %v1038
        %v1042 = vadd.f32 %v1032, %v1039
        %1043 = vset.pattern.permute.xlu0 25
        %1044 = vperm.xlu0 %1043, %v678
        %v1045 = vpop.permute.xlu0 %1044
        %v1047 = vmul.f32 %v1045, %v631
        %v1048 = vmul.f32 %v1045, %v632
        %v1049 = vmul.f32 %v1045, %v637
        %v1050 = vadd.f32 %v1040, %v1047
        %v1051 = vadd.f32 %v1041, %v1048
        %v1052 = vadd.f32 %v1042, %v1049
        %1053 = vset.pattern.permute.xlu0 32
        %1054 = vperm.xlu0 %1053, %v678
        %v1055 = vpop.permute.xlu0 %1054
        %v1057 = vmul.f32 %v1055, %v645
        %v1058 = vmul.f32 %v1055, %v646
        %v1059 = vmul.f32 %v1055, %v651
        %v1060 = vadd.f32 %v1050, %v1057
        %v1061 = vadd.f32 %v1051, %v1058
        %v1062 = vadd.f32 %v1052, %v1059
        %1063 = vset.pattern.permute.xlu0 39
        %1064 = vperm.xlu0 %1063, %v678
        %v1065 = vpop.permute.xlu0 %1064
        %v1067 = vmul.f32 %v1065, %v658
        %v1068 = vmul.f32 %v1065, %v659
        %v1069 = vmul.f32 %v1065, %v664
        %v1070 = vadd.f32 %v1060, %v1067
        %v1071 = vadd.f32 %v1061, %v1068
        %v1072 = vadd.f32 %v1062, %v1069
        %1073 = vset.pattern.permute.xlu0 46
        %1074 = vperm.xlu0 %1073, %v678
        %v1075 = vpop.permute.xlu0 %1074
        %v1077 = vmul.f32 %v1075, %v671
        %v1078 = vmul.f32 %v1075, %v672
        %v1079 = vmul.f32 %v1075, %v677
        %v1080 = vadd.f32 %v1070, %v1077
        %v1081 = vadd.f32 %v1071, %v1078
        %v1082 = vadd.f32 %v1072, %v1079
        %1086 = vrot.lane.b32.xlu0 %v1080, 127
        %v1087 = vpop.permute.xlu0 %1086
        %1088 = vrot.lane.b32.xlu0 %v1081, 127
        %v1089 = vpop.permute.xlu0 %1088
        %1090 = vrot.lane.b32.xlu0 %v1082, 127
        %v1091 = vpop.permute.xlu0 %1090
        %vm1092 = vcmask 1039360
        %v1093 = vsel %vm1092, %v1087, %v1089
        %v1094 = vsel %vm1092, %v1089, %v1091
        %v1097 = vlaneseq
        %v1098 = vshrl.u32 %v1097, 7
        %v1099 = vsub.s32 4, %v1098
        %v1100 = vrot.slane %v679, %v1099
        %v1101 = vlaneseq
        %v1102 = vshrl.u32 %v1101, 7
        %v1103 = vsub.s32 4, %v1102
        %v1104 = vrot.slane %v680, %v1103
        %v1105 = vmul.f32 %v1093, %v1100
        %v1106 = vmul.f32 %v1094, %v1104
        %v1107 = vadd.f32 %v1014, %v1105
        %v1108 = vadd.f32 %v1015, %v1106
        %1109 = vset.pattern.permute.xlu0 5
        %1110 = vperm.xlu0 %1109, %v678
        %v1111 = vpop.permute.xlu0 %1110
        %v1113 = vmul.f32 %v1111, %v592
        %v1114 = vmul.f32 %v1111, %v588
        %v1115 = vmul.f32 %v1111, %v593
        %1116 = vset.pattern.permute.xlu0 12
        %1117 = vperm.xlu0 %1116, %v678
        %v1118 = vpop.permute.xlu0 %1117
        %v1120 = vmul.f32 %v1118, %v603
        %v1121 = vmul.f32 %v1118, %v604
        %v1122 = vmul.f32 %v1118, %v609
        %v1123 = vadd.f32 %v1113, %v1120
        %v1124 = vadd.f32 %v1114, %v1121
        %v1125 = vadd.f32 %v1115, %v1122
        %1126 = vset.pattern.permute.xlu0 19
        %1127 = vperm.xlu0 %1126, %v678
        %v1128 = vpop.permute.xlu0 %1127
        %v1130 = vmul.f32 %v1128, %v617
        %v1131 = vmul.f32 %v1128, %v618
        %v1132 = vmul.f32 %v1128, %v623
        %v1133 = vadd.f32 %v1123, %v1130
        %v1134 = vadd.f32 %v1124, %v1131
        %v1135 = vadd.f32 %v1125, %v1132
        %1136 = vset.pattern.permute.xlu0 26
        %1137 = vperm.xlu0 %1136, %v678
        %v1138 = vpop.permute.xlu0 %1137
        %v1140 = vmul.f32 %v1138, %v631
        %v1141 = vmul.f32 %v1138, %v632
        %v1142 = vmul.f32 %v1138, %v637
        %v1143 = vadd.f32 %v1133, %v1140
        %v1144 = vadd.f32 %v1134, %v1141
        %v1145 = vadd.f32 %v1135, %v1142
        %1146 = vset.pattern.permute.xlu0 33
        %1147 = vperm.xlu0 %1146, %v678
        %v1148 = vpop.permute.xlu0 %1147
        %v1150 = vmul.f32 %v1148, %v645
        %v1151 = vmul.f32 %v1148, %v646
        %v1152 = vmul.f32 %v1148, %v651
        %v1153 = vadd.f32 %v1143, %v1150
        %v1154 = vadd.f32 %v1144, %v1151
        %v1155 = vadd.f32 %v1145, %v1152
        %1156 = vset.pattern.permute.xlu0 40
        %1157 = vperm.xlu0 %1156, %v678
        %v1158 = vpop.permute.xlu0 %1157
        %v1160 = vmul.f32 %v1158, %v658
        %v1161 = vmul.f32 %v1158, %v659
        %v1162 = vmul.f32 %v1158, %v664
        %v1163 = vadd.f32 %v1153, %v1160
        %v1164 = vadd.f32 %v1154, %v1161
        %v1165 = vadd.f32 %v1155, %v1162
        %1166 = vset.pattern.permute.xlu0 47
        %1167 = vperm.xlu0 %1166, %v678
        %v1168 = vpop.permute.xlu0 %1167
        %v1170 = vmul.f32 %v1168, %v671
        %v1171 = vmul.f32 %v1168, %v672
        %v1172 = vmul.f32 %v1168, %v677
        %v1173 = vadd.f32 %v1163, %v1170
        %v1174 = vadd.f32 %v1164, %v1171
        %v1175 = vadd.f32 %v1165, %v1172
        %1179 = vrot.lane.b32.xlu0 %v1173, 126
        %v1180 = vpop.permute.xlu0 %1179
        %1181 = vrot.lane.b32.xlu0 %v1174, 126
        %v1182 = vpop.permute.xlu0 %1181
        %1183 = vrot.lane.b32.xlu0 %v1175, 126
        %v1184 = vpop.permute.xlu0 %1183
        %vm1185 = vcmask 1031168
        %v1186 = vsel %vm1185, %v1180, %v1182
        %v1187 = vsel %vm1185, %v1182, %v1184
        %v1190 = vlaneseq
        %v1191 = vshrl.u32 %v1190, 7
        %v1192 = vsub.s32 5, %v1191
        %v1193 = vrot.slane %v679, %v1192
        %v1194 = vlaneseq
        %v1195 = vshrl.u32 %v1194, 7
        %v1196 = vsub.s32 5, %v1195
        %v1197 = vrot.slane %v680, %v1196
        %v1198 = vmul.f32 %v1186, %v1193
        %v1199 = vmul.f32 %v1187, %v1197
        %v1200 = vadd.f32 %v1107, %v1198
        %v1201 = vadd.f32 %v1108, %v1199
        %1202 = vset.pattern.permute.xlu0 6
        %1203 = vperm.xlu0 %1202, %v678
        %v1204 = vpop.permute.xlu0 %1203
        %v1206 = vmul.f32 %v1204, %v592
        %v1207 = vmul.f32 %v1204, %v588
        %v1208 = vmul.f32 %v1204, %v593
        %1209 = vset.pattern.permute.xlu0 13
        %1210 = vperm.xlu0 %1209, %v678
        %v1211 = vpop.permute.xlu0 %1210
        %v1213 = vmul.f32 %v1211, %v603
        %v1214 = vmul.f32 %v1211, %v604
        %v1215 = vmul.f32 %v1211, %v609
        %v1216 = vadd.f32 %v1206, %v1213
        %v1217 = vadd.f32 %v1207, %v1214
        %v1218 = vadd.f32 %v1208, %v1215
        %1219 = vset.pattern.permute.xlu0 20
        %1220 = vperm.xlu0 %1219, %v678
        %v1221 = vpop.permute.xlu0 %1220
        %v1223 = vmul.f32 %v1221, %v617
        %v1224 = vmul.f32 %v1221, %v618
        %v1225 = vmul.f32 %v1221, %v623
        %v1226 = vadd.f32 %v1216, %v1223
        %v1227 = vadd.f32 %v1217, %v1224
        %v1228 = vadd.f32 %v1218, %v1225
        %1229 = vset.pattern.permute.xlu0 27
        %1230 = vperm.xlu0 %1229, %v678
        %v1231 = vpop.permute.xlu0 %1230
        %v1233 = vmul.f32 %v1231, %v631
        %v1234 = vmul.f32 %v1231, %v632
        %v1235 = vmul.f32 %v1231, %v637
        %v1236 = vadd.f32 %v1226, %v1233
        %v1237 = vadd.f32 %v1227, %v1234
        %v1238 = vadd.f32 %v1228, %v1235
        %1239 = vset.pattern.permute.xlu0 34
        %1240 = vperm.xlu0 %1239, %v678
        %v1241 = vpop.permute.xlu0 %1240
        %v1243 = vmul.f32 %v1241, %v645
        %v1244 = vmul.f32 %v1241, %v646
        %v1245 = vmul.f32 %v1241, %v651
        %v1246 = vadd.f32 %v1236, %v1243
        %v1247 = vadd.f32 %v1237, %v1244
        %v1248 = vadd.f32 %v1238, %v1245
        %1249 = vset.pattern.permute.xlu0 41
        %1250 = vperm.xlu0 %1249, %v678
        %v1251 = vpop.permute.xlu0 %1250
        %v1253 = vmul.f32 %v1251, %v658
        %v1254 = vmul.f32 %v1251, %v659
        %v1255 = vmul.f32 %v1251, %v664
        %v1256 = vadd.f32 %v1246, %v1253
        %v1257 = vadd.f32 %v1247, %v1254
        %v1258 = vadd.f32 %v1248, %v1255
        %1259 = vset.pattern.permute.xlu0 48
        %1260 = vperm.xlu0 %1259, %v678
        %v1261 = vpop.permute.xlu0 %1260
        %v1263 = vmul.f32 %v1261, %v671
        %v1264 = vmul.f32 %v1261, %v672
        %v1265 = vmul.f32 %v1261, %v677
        %v1266 = vadd.f32 %v1256, %v1263
        %v1267 = vadd.f32 %v1257, %v1264
        %v1268 = vadd.f32 %v1258, %v1265
        %1272 = vrot.lane.b32.xlu0 %v1266, 125
        %v1273 = vpop.permute.xlu0 %1272
        %1274 = vrot.lane.b32.xlu0 %v1267, 125
        %v1275 = vpop.permute.xlu0 %1274
        %1276 = vrot.lane.b32.xlu0 %v1268, 125
        %v1277 = vpop.permute.xlu0 %1276
        %vm1278 = vcmask 1022976
        %v1279 = vsel %vm1278, %v1273, %v1275
        %v1280 = vsel %vm1278, %v1275, %v1277
        %v1283 = vlaneseq
        %v1284 = vshrl.u32 %v1283, 7
        %v1285 = vsub.s32 6, %v1284
        %v1286 = vrot.slane %v679, %v1285
        %v1287 = vlaneseq
        %v1288 = vshrl.u32 %v1287, 7
        %v1289 = vsub.s32 6, %v1288
        %v1290 = vrot.slane %v680, %v1289
        %v1291 = vmul.f32 %v1279, %v1286
        %v1292 = vmul.f32 %v1280, %v1290
        %v1293 = vadd.f32 %v1200, %v1291
        %v1294 = vadd.f32 %v1201, %v1292
        %v1297 = vrot.slane %v1293, 1
        %v1298 = vrot.slane %v1294, 1
        %v1301 = vadd.f32 %v1293, %v1297
        %v1302 = vadd.f32 %v1294, %v1298
        %v1303 = vxor.u32 %v1301, 2147483648
        %v1304 = vxor.u32 %v1302, 2147483648
        %v1305 = vmul.f32 %v1303, 1.442695
        %v1306 = vpow.pop %v1305
        %v1307 = vmul.f32 %v1304, 1.442695
        %v1308 = vpow.pop %v1307
        %v1309 = vadd.f32 %v1306, 1.0
        %v1310 = vadd.f32 %v1308, 1.0
        %v1311 = vrcp.pop %v1309
        %v1312 = vmul.f32 1.0, %v1311
        %v1313 = vrcp.pop %v1310
        %v1314 = vmul.f32 1.0, %v1313
        %v1315 = vlaneseq
        %v1316 = vshrl.u32 %v1315, 7
        %v1317 = vsub.s32 0, %v1316
        %v1318 = vrot.slane %v1312, %v1317
        %v1319 = vlaneseq
        %v1320 = vshrl.u32 %v1319, 7
        %v1321 = vsub.s32 0, %v1320
        %v1322 = vrot.slane %v1314, %v1321
        %v1323 = vmul.f32 %v531, %v1318
        %v1324 = vmul.f32 %v532, %v1322
        %v1325 = vmul.f32 %v533, %v1318
        %v1326 = vmul.f32 %v534, %v1322
        %v1327 = vmul.f32 %v535, %v1318
        %v1328 = vmul.f32 %v536, %v1322
        %v1329 = vmul.f32 %v537, %v1318
        %v1330 = vmul.f32 %v538, %v1322
        %1331 = vst [vmem:[%s242] sm:$0xff] %v1323
        %1332 = vst [vmem:[%s242 + $0x8] sm:$0xff] %v1324
        %1333 = vst [vmem:[%s242 + $0x10] sm:$0xff] %v1325
        %1334 = vst [vmem:[%s242 + $0x18] sm:$0xff] %v1326
        %1335 = vst [vmem:[%s242 + $0x20] sm:$0xff] %v1327
        %1336 = vst [vmem:[%s242 + $0x28] sm:$0xff] %v1328
        %1337 = vst [vmem:[%s242 + $0x30] sm:$0xff] %v1329
        %1338 = vst [vmem:[%s242 + $0x38] sm:$0xff] %v1330
        %s1339 = sand.u32 %s140, 1
        %s1340 = scalar_lea.sflag [#allocation4], %s1339
        %s1341 = sand.u32 %s140, 1
        %s1342 = smul.addr %s1341, 64
        %s1343 = scalar_lea.vmem [#allocation5], %s1342
        // Predicated region
        $region45: #{tpu_custom_call.1} parent=39 // pred_check
          %p1344 = pneg %p150
        $region46: #{tpu_custom_call.1} parent=39 // pred_check_branch
          %1346 = sbr.rel (%p1344) target = $region48
        $region47: #{tpu_custom_call.1} parent=39 // pred_region
          %s1348 = ssub.s32 1024, 1024
          %1349 = vsyncadd %s1340, %s1348
          %s1350 = smul.addr %s22, 8
          %s1351 = smul.addr %s1350, 128
          %s1352 = scalar_lea.hbm %s5, %s1351
          %s1353 = sshll.u32 %s1343, 4
          %s1354 = int_to_ptr.vmem [resolvable:$true] %s1353
          %1359 = dma.vmem_to_hbm [thread:$0]  %s1354, 1024, %s1352, %s1340, 256, 256, 16
        $region48: #{tpu_custom_call.1} parent=39 // pred_fallthru
          _
      $region40: #{tpu_custom_call.1} parent=5 // pred_fallthru
        _
      %p1360 = scmp.le.s32.totalorder 2, %s17
      // Predicated region
      $region49: #{tpu_custom_call.1} parent=5 // pred_check
        %p1361 = pneg %p1360
      $region50: #{tpu_custom_call.1} parent=5 // pred_check_branch
        %1363 = sbr.rel (%p1361) target = $region52
      $region51: #{tpu_custom_call.1} parent=5 // pred_region
        %s1364 = ssub.s32 %s17, 2
        // Predicated region
        $region53: #{tpu_custom_call.1} parent=51 // pred_check
          %p1365 = pneg %p156
        $region54: #{tpu_custom_call.1} parent=51 // pred_check_branch
          %1367 = sbr.rel (%p1365) target = $region56
        $region55: #{tpu_custom_call.1} parent=51 // pred_region
          %s1368 = sand.u32 %s141, 1
          %s1369 = scalar_lea.sflag [#allocation4], %s1368
          %s1370 = sand.u32 %s141, 1
          %s1371 = smul.addr %s1370, 64
          %s1372 = scalar_lea.vmem [#allocation5], %s1371
          %1373 = dma.done %s1369, 1024
        $region56: #{tpu_custom_call.1} parent=51 // pred_fallthru
          _
      $region52: #{tpu_custom_call.1} parent=5 // pred_fallthru
        _
    $region6: #{tpu_custom_call.1} parent=1 // loop_footer
      %s21 = sadd.s32 1, %s17
    $region7: #{tpu_custom_call.1} parent=1 // loop_footer_branch
      %16 = sbr.rel target = $region3
    $region8: #{tpu_custom_call.1} parent=1 // loop_exit
      _
    %1374 = vsyncpa [#allocation3], 1
    %s1375 = scalar_lea.sflag [#allocation3], 1
    %1376 = vsyncpa %s1375, 1
    %1377 = vsyncpa [#allocation4], 1
    %s1378 = scalar_lea.sflag [#allocation4], 1
    %1379 = vsyncpa %s1378, 1

</llo_original>
